<compile_context>
chip_gen: v7x
topology: tpu7x:2x2x1
jax: 0.10.0
libtpu: 0.0.40
codegen_flags: <defaults>
</compile_context>

<pallas_src>
import jax
import jax.numpy as jnp
from jax import lax
from jax.experimental import pallas as pl
from jax.experimental.pallas import tpu as pltpu


def basic_block(x, w1, g1, be1, m1, v1, w2, g2, be2, m2, v2, eps=1e-5):
    """x: (N, H, W, Cin) NHWC; conv weights HWIO (3,3,Cin,Cout); returns NHWC."""
    N, H, W, Cin = x.shape
    Cout = w1.shape[-1]
    if Cin != Cout:
        raise ValueError("identity residual requires Cin == Cout "
                         "(stride=1, downsample=None BasicBlock)")

    Lin, Lout = W * Cin, W * Cout

    # ---- fold inference-mode BN into per-channel scale/bias (wrapper, exact)
    def fold_bn(gamma, beta, mean, var):
        scale = gamma / jnp.sqrt(var + eps)
        return scale, beta - mean * scale

    s1, bb1 = fold_bn(g1, be1, m1, v1)
    s2, bb2 = fold_bn(g2, be2, m2, v2)

    # ---- lane-dense, width-packed block-diagonal conv weights (wrapper).
    # Wblk[(ky,kx,w,ci), (w',co)] = w[ky,kx,ci,co] * scale[co] * (w == w')
    #                              * valid(w, kx)
    # where valid(w, kx) zeroes contributions that would read outside the image
    # horizontally -> no runtime boundary masking needed in the kernel.
    def dense_weights(w_hwio, scale):
        ci, co = w_hwio.shape[2], w_hwio.shape[3]
        wf = w_hwio * scale                               # fold BN scale
        eye = jnp.eye(W, dtype=wf.dtype)
        blk = jnp.einsum("ykio,wv->ykwivo", wf, eye)      # (3,3,W,Cin,W,Cout)
        wi = jnp.arange(W)[None, :]                       # (1, W)
        dx = (jnp.arange(3) - 1)[:, None]                 # (3, 1)
        valid = ((wi + dx) >= 0) & ((wi + dx) < W)        # (3, W)
        blk = blk * valid[None, :, :, None, None, None].astype(wf.dtype)
        return blk.reshape(9 * W * ci, W * co)

    w1_d = dense_weights(w1, s1)                          # (9*Lin,  Lout)
    w2_d = dense_weights(w2, s2)                          # (9*Lout, Lout)
    b1_d = jnp.tile(bb1, W).reshape(1, Lout)              # lane-dense bias
    b2_d = jnp.tile(bb2, W).reshape(1, Lout)
    x_d = x.reshape(N, H, Lin)                            # lane-dense input slab

    # ------------------------------------------------------------------ kernel
    def kernel(x_ref, w1_ref, b1_ref, w2_ref, b2_ref, o_ref):
        C, L = Cin, Lin                                   # == Cout, Lout (checked)
        xv = x_ref[0].astype(jnp.float32)                 # (H, W*C), dense load
        zrow = jnp.zeros((1, L), jnp.float32)

        def conv3x3(t, w_ref, b_ref):
            # t: (H, W*C) lane-dense activations.
            taps = []
            for ky in range(3):
                dy = ky - 1
                if dy == -1:       # row h reads t[h-1]; row 0 is zero padding
                    tr = jnp.concatenate([zrow, t[:H - 1, :]], axis=0)
                elif dy == 1:      # row h reads t[h+1]; row H-1 is zero padding
                    tr = jnp.concatenate([t[1:, :], zrow], axis=0)
                else:
                    tr = t
                for kx in range(3):
                    dx = kx - 1
                    if dx == 0:
                        taps.append(tr)
                    else:
                        # XLU lane rotation so lane w*C+ci sees column w+dx;
                        # wrapped (out-of-image) lanes hit zeroed weight rows.
                        taps.append(pltpu.roll(tr, (-dx * C) % L, axis=1))
            patches = jnp.concatenate(taps, axis=1)       # (H, 9*W*C), lane-dense
            return jnp.dot(patches, w_ref[...],
                           preferred_element_type=jnp.float32) + b_ref[...]

        # conv1 + folded-bn1 + relu
        y = jnp.maximum(conv3x3(xv, w1_ref, b1_ref), 0.0)
        # conv2 + folded-bn2
        z = conv3x3(y, w2_ref, b2_ref)
        # residual (identity) + relu; store is one full unmasked (H, 128) slab
        o_ref[0] = jnp.maximum(z + xv, 0.0).astype(o_ref.dtype)

    grid_spec = pltpu.PrefetchScalarGridSpec(
        num_scalar_prefetch=0,
        grid=(N,),
        in_specs=[
            pl.BlockSpec((1, H, Lin), lambda n: (n, 0, 0)),      # x (lane-dense)
            pl.BlockSpec((9 * Lin, Lout), lambda n: (0, 0)),     # w1 block-dense
            pl.BlockSpec((1, Lout), lambda n: (0, 0)),           # b1
            pl.BlockSpec((9 * Lout, Lout), lambda n: (0, 0)),    # w2 block-dense
            pl.BlockSpec((1, Lout), lambda n: (0, 0)),           # b2
        ],
        out_specs=pl.BlockSpec((1, H, Lout), lambda n: (n, 0, 0)),
    )

    out_d = pl.pallas_call(
        kernel,
        out_shape=jax.ShapeDtypeStruct((N, H, Lout), x.dtype),
        grid_spec=grid_spec,
        compiler_params=pltpu.CompilerParams(
            dimension_semantics=("parallel",)),
    )(x_d, w1_d, b1_d, w2_d, b2_d)

    return out_d.reshape(N, H, W, Cout)


def reference(x, w1, g1, be1, m1, v1, w2, g2, be2, m2, v2, eps):
    """Pure-JAX reference of BasicBlock.forward (eval-mode BN, stride=1, no downsample)."""
    def conv(t, w):
        return lax.conv_general_dilated(
            t, w, window_strides=(1, 1), padding=((1, 1), (1, 1)),
            dimension_numbers=("NHWC", "HWIO", "NHWC"))

    def bn(t, g, b, m, v):
        return (t - m) / jnp.sqrt(v + eps) * g + b

    y = jax.nn.relu(bn(conv(x, w1), g1, be1, m1, v1))
    z = bn(conv(y, w2), g2, be2, m2, v2)
    return jax.nn.relu(z + x)


if __name__ == "__main__":
    N, H, W = 2, 16, 16
    Cin = Cout = 8          # inplanes == planes, stride=1, downsample=None
    eps = 1e-5

    key = jax.random.PRNGKey(0)
    keys = jax.random.split(key, 11)
    x = jax.random.normal(keys[0], (N, H, W, Cin), jnp.float32)

    w1 = jax.random.normal(keys[1], (3, 3, Cin, Cout), jnp.float32) * 0.1
    g1 = jax.random.uniform(keys[2], (Cout,), jnp.float32, 0.5, 1.5)
    be1 = jax.random.normal(keys[3], (Cout,), jnp.float32) * 0.1
    m1 = jax.random.normal(keys[4], (Cout,), jnp.float32) * 0.1
    v1 = jax.random.uniform(keys[5], (Cout,), jnp.float32, 0.5, 1.5)

    w2 = jax.random.normal(keys[6], (3, 3, Cout, Cout), jnp.float32) * 0.1
    g2 = jax.random.uniform(keys[7], (Cout,), jnp.float32, 0.5, 1.5)
    be2 = jax.random.normal(keys[8], (Cout,), jnp.float32) * 0.1
    m2 = jax.random.normal(keys[9], (Cout,), jnp.float32) * 0.1
    v2 = jax.random.uniform(keys[10], (Cout,), jnp.float32, 0.5, 1.5)

    out = jax.block_until_ready(
        basic_block(x, w1, g1, be1, m1, v1, w2, g2, be2, m2, v2, eps))
    ref = jax.block_until_ready(
        reference(x, w1, g1, be1, m1, v1, w2, g2, be2, m2, v2, eps))

    assert out.shape == (N, H, W, Cout)
    if not bool(jnp.allclose(out, ref, atol=1e-4, rtol=1e-4)):
        raise AssertionError(
            f"mismatch: max abs diff = {float(jnp.max(jnp.abs(out - ref)))}")
    print("KERNEL_OK")
</pallas_src>

<mosaic_0001>
module attributes {stable_mosaic.version = 11 : i64} {
  func.func @kernel(%arg0: i32, %arg1: memref<1x16x128xf32, #tpu.memory_space<vmem>>, %arg2: memref<1152x128xf32, #tpu.memory_space<vmem>>, %arg3: memref<1x128xf32, #tpu.memory_space<vmem>>, %arg4: memref<1152x128xf32, #tpu.memory_space<vmem>>, %arg5: memref<1x128xf32, #tpu.memory_space<vmem>>, %arg6: memref<1x16x128xf32, #tpu.memory_space<vmem>>) attributes {dimension_semantics = [#tpu.dimension_semantics<parallel>], iteration_bounds = array<i64: 2>, scalar_prefetch = 0 : i64, scratch_operands = 0 : i64, tpu.core_type = #tpu.core_type<tc>, window_params = [{transform_indices = @transform_0, window_bounds = array<i64: 1, 16, 128>}, {pipeline_mode = #tpu.pipeline_mode<synchronous>, transform_indices = @transform_1, window_bounds = array<i64: 1152, 128>}, {pipeline_mode = #tpu.pipeline_mode<synchronous>, transform_indices = @transform_2, window_bounds = array<i64: 1, 128>}, {pipeline_mode = #tpu.pipeline_mode<synchronous>, transform_indices = @transform_3, window_bounds = array<i64: 1152, 128>}, {pipeline_mode = #tpu.pipeline_mode<synchronous>, transform_indices = @transform_4, window_bounds = array<i64: 1, 128>}, {transform_indices = @transform_5, window_bounds = array<i64: 1, 16, 128>}]} {
    %c0 = arith.constant 0 : index
    %c0_0 = arith.constant 0 : index
    %c0_1 = arith.constant 0 : index
    %0 = vector.load %arg1[%c0, %c0_0, %c0_1] : memref<1x16x128xf32, #tpu.memory_space<vmem>>, vector<1x16x128xf32>
    %1 = vector.shape_cast %0 : vector<1x16x128xf32> to vector<16x128xf32>
    %cst = arith.constant 0.000000e+00 : f32
    %2 = vector.broadcast %cst : f32 to vector<1x128xf32>
    %3 = vector.extract_strided_slice %1 {offsets = [0, 0], sizes = [15, 128], strides = [1, 1]} : vector<16x128xf32> to vector<15x128xf32>
    %4 = tpu.concatenate %2, %3 in 0 : vector<1x128xf32>, vector<15x128xf32> -> vector<16x128xf32>
    %c8_i32 = arith.constant 8 : i32
    %5 = tpu.dynamic_rotate %4 by %c8_i32 dim 1 : vector<16x128xf32>, i32 -> vector<16x128xf32>
    %c120_i32 = arith.constant 120 : i32
    %6 = tpu.dynamic_rotate %4 by %c120_i32 dim 1 : vector<16x128xf32>, i32 -> vector<16x128xf32>
    %c8_i32_2 = arith.constant 8 : i32
    %7 = tpu.dynamic_rotate %1 by %c8_i32_2 dim 1 : vector<16x128xf32>, i32 -> vector<16x128xf32>
    %c120_i32_3 = arith.constant 120 : i32
    %8 = tpu.dynamic_rotate %1 by %c120_i32_3 dim 1 : vector<16x128xf32>, i32 -> vector<16x128xf32>
    %9 = vector.extract_strided_slice %1 {offsets = [1, 0], sizes = [15, 128], strides = [1, 1]} : vector<16x128xf32> to vector<15x128xf32>
    %10 = tpu.concatenate %9, %2 in 0 : vector<15x128xf32>, vector<1x128xf32> -> vector<16x128xf32>
    %c8_i32_4 = arith.constant 8 : i32
    %11 = tpu.dynamic_rotate %10 by %c8_i32_4 dim 1 : vector<16x128xf32>, i32 -> vector<16x128xf32>
    %c120_i32_5 = arith.constant 120 : i32
    %12 = tpu.dynamic_rotate %10 by %c120_i32_5 dim 1 : vector<16x128xf32>, i32 -> vector<16x128xf32>
    %13 = tpu.concatenate %5, %4, %6, %7, %1, %8, %11, %10, %12 in 1 : vector<16x128xf32>, vector<16x128xf32>, vector<16x128xf32>, vector<16x128xf32>, vector<16x128xf32>, vector<16x128xf32>, vector<16x128xf32>, vector<16x128xf32>, vector<16x128xf32> -> vector<16x1152xf32>
    %c0_6 = arith.constant 0 : index
    %c0_7 = arith.constant 0 : index
    %14 = vector.load %arg2[%c0_6, %c0_7] : memref<1152x128xf32, #tpu.memory_space<vmem>>, vector<1152x128xf32>
    %cst_8 = arith.constant dense<0.000000e+00> : vector<16x128xf32>
    %15 = tpu.matmul %13, %14, %cst_8 {dimension_numbers = #tpu.dot_dimension_numbers<[1], [0], [0], [1], [0, 0, 1, 1], [], []>} : vector<16x1152xf32>, vector<1152x128xf32>, vector<16x128xf32> -> vector<16x128xf32>
    %c0_9 = arith.constant 0 : index
    %c0_10 = arith.constant 0 : index
    %16 = vector.load %arg3[%c0_9, %c0_10] : memref<1x128xf32, #tpu.memory_space<vmem>>, vector<1x128xf32>
    %17 = vector.broadcast %16 : vector<1x128xf32> to vector<16x128xf32>
    %18 = arith.addf %15, %17 : vector<16x128xf32>
    %cst_11 = arith.constant 0.000000e+00 : f32
    %19 = vector.broadcast %cst_11 : f32 to vector<16x128xf32>
    %20 = arith.maximumf %18, %19 : vector<16x128xf32>
    %21 = vector.extract_strided_slice %20 {offsets = [0, 0], sizes = [15, 128], strides = [1, 1]} : vector<16x128xf32> to vector<15x128xf32>
    %22 = tpu.concatenate %2, %21 in 0 : vector<1x128xf32>, vector<15x128xf32> -> vector<16x128xf32>
    %c8_i32_12 = arith.constant 8 : i32
    %23 = tpu.dynamic_rotate %22 by %c8_i32_12 dim 1 : vector<16x128xf32>, i32 -> vector<16x128xf32>
    %c120_i32_13 = arith.constant 120 : i32
    %24 = tpu.dynamic_rotate %22 by %c120_i32_13 dim 1 : vector<16x128xf32>, i32 -> vector<16x128xf32>
    %c8_i32_14 = arith.constant 8 : i32
    %25 = tpu.dynamic_rotate %20 by %c8_i32_14 dim 1 : vector<16x128xf32>, i32 -> vector<16x128xf32>
    %c120_i32_15 = arith.constant 120 : i32
    %26 = tpu.dynamic_rotate %20 by %c120_i32_15 dim 1 : vector<16x128xf32>, i32 -> vector<16x128xf32>
    %27 = vector.extract_strided_slice %20 {offsets = [1, 0], sizes = [15, 128], strides = [1, 1]} : vector<16x128xf32> to vector<15x128xf32>
    %28 = tpu.concatenate %27, %2 in 0 : vector<15x128xf32>, vector<1x128xf32> -> vector<16x128xf32>
    %c8_i32_16 = arith.constant 8 : i32
    %29 = tpu.dynamic_rotate %28 by %c8_i32_16 dim 1 : vector<16x128xf32>, i32 -> vector<16x128xf32>
    %c120_i32_17 = arith.constant 120 : i32
    %30 = tpu.dynamic_rotate %28 by %c120_i32_17 dim 1 : vector<16x128xf32>, i32 -> vector<16x128xf32>
    %31 = tpu.concatenate %23, %22, %24, %25, %20, %26, %29, %28, %30 in 1 : vector<16x128xf32>, vector<16x128xf32>, vector<16x128xf32>, vector<16x128xf32>, vector<16x128xf32>, vector<16x128xf32>, vector<16x128xf32>, vector<16x128xf32>, vector<16x128xf32> -> vector<16x1152xf32>
    %c0_18 = arith.constant 0 : index
    %c0_19 = arith.constant 0 : index
    %32 = vector.load %arg4[%c0_18, %c0_19] : memref<1152x128xf32, #tpu.memory_space<vmem>>, vector<1152x128xf32>
    %cst_20 = arith.constant dense<0.000000e+00> : vector<16x128xf32>
    %33 = tpu.matmul %31, %32, %cst_20 {dimension_numbers = #tpu.dot_dimension_numbers<[1], [0], [0], [1], [0, 0, 1, 1], [], []>} : vector<16x1152xf32>, vector<1152x128xf32>, vector<16x128xf32> -> vector<16x128xf32>
    %c0_21 = arith.constant 0 : index
    %c0_22 = arith.constant 0 : index
    %34 = vector.load %arg5[%c0_21, %c0_22] : memref<1x128xf32, #tpu.memory_space<vmem>>, vector<1x128xf32>
    %35 = vector.broadcast %34 : vector<1x128xf32> to vector<16x128xf32>
    %36 = arith.addf %33, %35 : vector<16x128xf32>
    %37 = arith.addf %36, %1 : vector<16x128xf32>
    %cst_23 = arith.constant 0.000000e+00 : f32
    %38 = vector.broadcast %cst_23 : f32 to vector<16x128xf32>
    %39 = arith.maximumf %37, %38 : vector<16x128xf32>
    %c0_24 = arith.constant 0 : index
    %c0_25 = arith.constant 0 : index
    %c0_26 = arith.constant 0 : index
    %40 = vector.load %arg6[%c0_24, %c0_25, %c0_26] : memref<1x16x128xf32, #tpu.memory_space<vmem>>, vector<1x16x128xf32>
    %41 = vector.shape_cast %40 : vector<1x16x128xf32> to vector<16x128xf32>
    %42 = vector.shape_cast %39 : vector<16x128xf32> to vector<1x16x128xf32>
    tpu.vector_store %arg6[%c0_24, %c0_25, %c0_26], %42 {strides = array<i32>} : memref<1x16x128xf32, #tpu.memory_space<vmem>>, vector<1x16x128xf32>,
    return
  }
  func.func @transform_0(%arg0: i32) -> (i32, i32, i32) {
    %c0_i32 = arith.constant 0 : i32
    %c0_i32_0 = arith.constant 0 : i32
    %c0_i32_1 = arith.constant 0 : i32
    return %arg0, %c0_i32, %c0_i32_0 : i32, i32, i32
  }
  func.func @transform_1(%arg0: i32) -> (i32, i32) {
    %c0_i32 = arith.constant 0 : i32
    %c0_i32_0 = arith.constant 0 : i32
    %c0_i32_1 = arith.constant 0 : i32
    return %c0_i32, %c0_i32_0 : i32, i32
  }
  func.func @transform_2(%arg0: i32) -> (i32, i32) {
    %c0_i32 = arith.constant 0 : i32
    %c0_i32_0 = arith.constant 0 : i32
    %c0_i32_1 = arith.constant 0 : i32
    return %c0_i32, %c0_i32_0 : i32, i32
  }
  func.func @transform_3(%arg0: i32) -> (i32, i32) {
    %c0_i32 = arith.constant 0 : i32
    %c0_i32_0 = arith.constant 0 : i32
    %c0_i32_1 = arith.constant 0 : i32
    return %c0_i32, %c0_i32_0 : i32, i32
  }
  func.func @transform_4(%arg0: i32) -> (i32, i32) {
    %c0_i32 = arith.constant 0 : i32
    %c0_i32_0 = arith.constant 0 : i32
    %c0_i32_1 = arith.constant 0 : i32
    return %c0_i32, %c0_i32_0 : i32, i32
  }
  func.func @transform_5(%arg0: i32) -> (i32, i32, i32) {
    %c0_i32 = arith.constant 0 : i32
    %c0_i32_0 = arith.constant 0 : i32
    %c0_i32_1 = arith.constant 0 : i32
    return %arg0, %c0_i32, %c0_i32_0 : i32, i32, i32
  }
}

</mosaic_0001>

<llo_original>
// kernel: tpu_custom_call.1
$region0: #{tpu_custom_call.1}
  #allocation0 [shape = 'u32[]', space=smem, size = 0x4, offset = 0x4, fixed_abs, tag = 'smem constant byte address 0x4 - core index']
  #allocation1 [shape = 'u32[144,128]{1,0:T(1,128)}', space=vmem, size = 0x12000, scoped, tag = 'internal scratch']
  %s0 = inlined_call_operand.hbm [shape: f32[2,16,128], index: 0, kind: input, shape index: {}]
  %s1 = inlined_call_operand.hbm [shape: f32[1152,128], index: 1, kind: input, shape index: {}]
  %s2 = inlined_call_operand.vmem [shape: f32[1,128], index: 2, kind: input, shape index: {}]
  %s3 = inlined_call_operand.hbm [shape: f32[1152,128], index: 3, kind: input, shape index: {}]
  %s4 = inlined_call_operand.vmem [shape: f32[1,128], index: 4, kind: input, shape index: {}]
  %s5 = inlined_call_operand.hbm [shape: f32[2,16,128], index: 5, kind: output, shape index: {}]
  %s6 = sld [smem:[#allocation0]]
  $region65: #{tpu_custom_call.1} parent=0
    _
  %s8 = ssub.s32 1, %s6
  %s9 = scalar_select 0, %s8, %s6
  $region1: #{tpu_custom_call.1} parent=0
    #allocation2 [shape = 'u8[16384]{0}', space=vmem, size = 0x4000, scoped, tag = 'input window, operand 0']
    #allocation3 [shape = 's32[2]{0}', space=sflag, size = 0x8, scoped, tag = 'scoped memory for tpu_custom_call.1']
    #allocation4 [shape = 's32[2]{0}', space=sflag, size = 0x8, scoped, tag = 'scoped memory for tpu_custom_call.1']
    #allocation5 [shape = 'u8[589824]{0}', space=vmem, size = 0x90000, scoped, tag = 'input window, operand 1, single buffered']
    #allocation6 [shape = 's32[1]{0}', space=sflag, size = 0x4, scoped, tag = 'scoped memory for tpu_custom_call.1']
    #allocation7 [shape = 'u8[589824]{0}', space=vmem, size = 0x90000, scoped, tag = 'input window, operand 3, single buffered']
    #allocation8 [shape = 'u8[16384]{0}', space=vmem, size = 0x4000, scoped, tag = 'output window, operand 0']
    %10 = vsyncpa [#allocation3], 0
    %s11 = scalar_lea.sflag [#allocation3], 1
    %12 = vsyncpa %s11, 0
    %13 = vsyncpa [#allocation6], 0
    %14 = vsyncpa [#allocation4], 0
    %s15 = scalar_lea.sflag [#allocation4], 1
    %16 = vsyncpa %s15, 0
    loop: start=0, step=1, limit=4
    $region2: #{tpu_custom_call.1} parent=1 // loop_pre_header
      _
    $region3: #{tpu_custom_call.1} parent=1 // loop_header
      %s18 = sphi 0, %s22
      %p19 = scmp.ge.s32.totalorder %s18, 4
      %s28 = sphi 0, %s30
      %s31 = sphi 0, %s28
      %s32 = sphi 0, %s31
      %s48 = sphi 0, %s32
      %s52 = sphi 0, %s52
      %s54 = sphi 0, %s52
      %s55 = sphi 0, %s54
      %s69 = sphi 0, %s55
      %s73 = sphi 0, %s73
      %s75 = sphi 0, %s73
      %s76 = sphi 0, %s75
      %s90 = sphi 0, %s76
      %s94 = sphi 0, %s94
      %s96 = sphi 0, %s94
      %s97 = sphi 0, %s96
      %s111 = sphi 0, %s97
      %s115 = sphi 0, %s115
      %s117 = sphi 0, %s115
      %s118 = sphi 0, %s117
      %s132 = sphi 0, %s118
      %s138 = sphi 0, %s140
      %s141 = sphi 0, %s138
      %s142 = sphi 0, %s141
      %s158 = sphi 0, %s142
    $region4: #{tpu_custom_call.1} parent=1 // loop_header_branch
      %21 = sbr.rel (%p19) target = $region8
    $region5: #{tpu_custom_call.1} parent=1 // loop_body
      %s23 = ssub.s32 %s18, 1
      %s24 = ssub.s32 %s18, 2
      %s25 = sadd.s32 %s18, 1
      %s26 = ssub.s32 %s18, %s25
      %p27 = scmp.eq.s32.totalorder %s26, 0
      %s29 = sadd.s32 %s28, 1
      %s30 = scalar_select %p27, %s28, %s29
      %p33 = pneg %p27
      %p34 = scmp.eq.s32.totalorder %s18, 1
      %p35 = por %p33, %p34
      %p36 = scmp.ne.s32.totalorder %s28, %s31
      %p37 = scmp.eq.s32.totalorder %s18, 0
      %p38 = por %p36, %p37
      %p39 = scmp.ne.s32.totalorder %s28, %s31
      %p40 = scmp.eq.s32.totalorder %s23, 1
      %p41 = por %p39, %p40
      %p42 = scmp.ne.s32.totalorder %s31, %s32
      %p43 = scmp.eq.s32.totalorder %s23, 0
      %p44 = por %p42, %p43
      %p45 = scmp.ne.s32.totalorder %s31, %s32
      %p46 = scmp.eq.s32.totalorder %s24, 1
      %p47 = por %p45, %p46
      %p49 = scmp.ne.s32.totalorder %s32, %s48
      %p50 = scmp.eq.s32.totalorder %s24, 0
      %p51 = por %p49, %p50
      %s53 = sadd.s32 %s52, 1
      %p56 = scmp.eq.s32.totalorder %s18, 1
      %p57 = scmp.ne.s32.totalorder %s52, %s54
      %p58 = scmp.eq.s32.totalorder %s18, 0
      %p59 = por %p57, %p58
      %p60 = scmp.ne.s32.totalorder %s52, %s54
      %p61 = scmp.eq.s32.totalorder %s23, 1
      %p62 = por %p60, %p61
      %p63 = scmp.ne.s32.totalorder %s54, %s55
      %p64 = scmp.eq.s32.totalorder %s23, 0
      %p65 = por %p63, %p64
      %p66 = scmp.ne.s32.totalorder %s54, %s55
      %p67 = scmp.eq.s32.totalorder %s24, 1
      %p68 = por %p66, %p67
      %p70 = scmp.ne.s32.totalorder %s55, %s69
      %p71 = scmp.eq.s32.totalorder %s24, 0
      %p72 = por %p70, %p71
      %s74 = sadd.s32 %s73, 1
      %p77 = scmp.eq.s32.totalorder %s18, 1
      %p78 = scmp.ne.s32.totalorder %s73, %s75
      %p79 = scmp.eq.s32.totalorder %s18, 0
      %p80 = por %p78, %p79
      %p81 = scmp.ne.s32.totalorder %s73, %s75
      %p82 = scmp.eq.s32.totalorder %s23, 1
      %p83 = por %p81, %p82
      %p84 = scmp.ne.s32.totalorder %s75, %s76
      %p85 = scmp.eq.s32.totalorder %s23, 0
      %p86 = por %p84, %p85
      %p87 = scmp.ne.s32.totalorder %s75, %s76
      %p88 = scmp.eq.s32.totalorder %s24, 1
      %p89 = por %p87, %p88
      %p91 = scmp.ne.s32.totalorder %s76, %s90
      %p92 = scmp.eq.s32.totalorder %s24, 0
      %p93 = por %p91, %p92
      %s95 = sadd.s32 %s94, 1
      %p98 = scmp.eq.s32.totalorder %s18, 1
      %p99 = scmp.ne.s32.totalorder %s94, %s96
      %p100 = scmp.eq.s32.totalorder %s18, 0
      %p101 = por %p99, %p100
      %p102 = scmp.ne.s32.totalorder %s94, %s96
      %p103 = scmp.eq.s32.totalorder %s23, 1
      %p104 = por %p102, %p103
      %p105 = scmp.ne.s32.totalorder %s96, %s97
      %p106 = scmp.eq.s32.totalorder %s23, 0
      %p107 = por %p105, %p106
      %p108 = scmp.ne.s32.totalorder %s96, %s97
      %p109 = scmp.eq.s32.totalorder %s24, 1
      %p110 = por %p108, %p109
      %p112 = scmp.ne.s32.totalorder %s97, %s111
      %p113 = scmp.eq.s32.totalorder %s24, 0
      %p114 = por %p112, %p113
      %s116 = sadd.s32 %s115, 1
      %p119 = scmp.eq.s32.totalorder %s18, 1
      %p120 = scmp.ne.s32.totalorder %s115, %s117
      %p121 = scmp.eq.s32.totalorder %s18, 0
      %p122 = por %p120, %p121
      %p123 = scmp.ne.s32.totalorder %s115, %s117
      %p124 = scmp.eq.s32.totalorder %s23, 1
      %p125 = por %p123, %p124
      %p126 = scmp.ne.s32.totalorder %s117, %s118
      %p127 = scmp.eq.s32.totalorder %s23, 0
      %p128 = por %p126, %p127
      %p129 = scmp.ne.s32.totalorder %s117, %s118
      %p130 = scmp.eq.s32.totalorder %s24, 1
      %p131 = por %p129, %p130
      %p133 = scmp.ne.s32.totalorder %s118, %s132
      %p134 = scmp.eq.s32.totalorder %s24, 0
      %p135 = por %p133, %p134
      %s136 = ssub.s32 %s18, %s25
      %p137 = scmp.eq.s32.totalorder %s136, 0
      %s139 = sadd.s32 %s138, 1
      %s140 = scalar_select %p137, %s138, %s139
      %p143 = pneg %p137
      %p144 = scmp.eq.s32.totalorder %s18, 1
      %p145 = por %p143, %p144
      %p146 = scmp.ne.s32.totalorder %s138, %s141
      %p147 = scmp.eq.s32.totalorder %s18, 0
      %p148 = por %p146, %p147
      %p149 = scmp.ne.s32.totalorder %s138, %s141
      %p150 = scmp.eq.s32.totalorder %s23, 1
      %p151 = por %p149, %p150
      %p152 = scmp.ne.s32.totalorder %s141, %s142
      %p153 = scmp.eq.s32.totalorder %s23, 0
      %p154 = por %p152, %p153
      %p155 = scmp.ne.s32.totalorder %s141, %s142
      %p156 = scmp.eq.s32.totalorder %s24, 1
      %p157 = por %p155, %p156
      %p159 = scmp.ne.s32.totalorder %s142, %s158
      %p160 = scmp.eq.s32.totalorder %s24, 0
      %p161 = por %p159, %p160
      %p162 = scmp.le.s32.totalorder 1, %s18
      %p163 = scmp.lt.s32.totalorder %s18, 3
      %p164 = pnand %p162, %p163
      %p165 = pneg %p164
      // Predicated region
      $region9: #{tpu_custom_call.1} parent=5 // pred_check
        _
      $region10: #{tpu_custom_call.1} parent=5 // pred_check_branch
        %167 = sbr.rel (%p164) target = $region12
      $region11: #{tpu_custom_call.1} parent=5 // pred_region
        %s168 = ssub.s32 %s18, 1
        // Predicated region
        $region13: #{tpu_custom_call.1} parent=11 // pred_check
          %p169 = pneg %p65
        $region14: #{tpu_custom_call.1} parent=11 // pred_check_branch
          %171 = sbr.rel (%p169) target = $region16
        $region15: #{tpu_custom_call.1} parent=11 // pred_region
          %s173 = ssub.s32 18432, 18432
          %174 = vsyncadd [#allocation6], %s173
          %s175 = sshll.u32 [#allocation5], 4
          %s176 = int_to_ptr.vmem [resolvable:$true] %s175
          %181 = dma.hbm_to_vmem [thread:$0]  %s1, 18432, %s176, [#allocation6], 128, 128, 8
        $region16: #{tpu_custom_call.1} parent=11 // pred_fallthru
          _
        // Predicated region
        $region17: #{tpu_custom_call.1} parent=11 // pred_check
          %p182 = pneg %p86
        $region18: #{tpu_custom_call.1} parent=11 // pred_check_branch
          %184 = sbr.rel (%p182) target = $region20
        $region19: #{tpu_custom_call.1} parent=11 // pred_region
          _
        $region20: #{tpu_custom_call.1} parent=11 // pred_fallthru
          _
        // Predicated region
        $region21: #{tpu_custom_call.1} parent=11 // pred_check
          %p185 = pneg %p107
        $region22: #{tpu_custom_call.1} parent=11 // pred_check_branch
          %187 = sbr.rel (%p185) target = $region24
        $region23: #{tpu_custom_call.1} parent=11 // pred_region
          %s189 = ssub.s32 18432, 18432
          %190 = vsyncadd [#allocation6], %s189
          %s191 = sshll.u32 [#allocation7], 4
          %s192 = int_to_ptr.vmem [resolvable:$true] %s191
          %197 = dma.hbm_to_vmem [thread:$0]  %s3, 18432, %s192, [#allocation6], 128, 128, 8
        $region24: #{tpu_custom_call.1} parent=11 // pred_fallthru
          _
        // Predicated region
        $region25: #{tpu_custom_call.1} parent=11 // pred_check
          %p198 = pneg %p128
        $region26: #{tpu_custom_call.1} parent=11 // pred_check_branch
          %200 = sbr.rel (%p198) target = $region28
        $region27: #{tpu_custom_call.1} parent=11 // pred_region
          _
        $region28: #{tpu_custom_call.1} parent=11 // pred_fallthru
          _
      $region12: #{tpu_custom_call.1} parent=5 // pred_fallthru
        _
      %p201 = scmp.lt.s32.totalorder %s18, 2
      // Predicated region
      $region29: #{tpu_custom_call.1} parent=5 // pred_check
        %p202 = pneg %p201
      $region30: #{tpu_custom_call.1} parent=5 // pred_check_branch
        %204 = sbr.rel (%p202) target = $region32
      $region31: #{tpu_custom_call.1} parent=5 // pred_region
        // Predicated region
        $region33: #{tpu_custom_call.1} parent=31 // pred_check
          %p205 = pneg %p38
        $region34: #{tpu_custom_call.1} parent=31 // pred_check_branch
          %207 = sbr.rel (%p205) target = $region36
        $region35: #{tpu_custom_call.1} parent=31 // pred_region
          %s208 = sand.u32 %s28, 1
          %s209 = scalar_lea.sflag [#allocation3], %s208
          %s210 = sand.u32 %s28, 1
          %s211 = smul.addr %s210, 16
          %s212 = scalar_lea.vmem [#allocation2], %s211
          %s214 = ssub.s32 256, 256
          %215 = vsyncadd %s209, %s214
          %s216 = smul.addr %s18, 2
          %s217 = smul.addr %s216, 128
          %s218 = scalar_lea.hbm %s0, %s217
          %s219 = sshll.u32 %s212, 4
          %s220 = int_to_ptr.vmem [resolvable:$true] %s219
          %225 = dma.hbm_to_vmem [thread:$0]  %s218, 256, %s220, %s209, 128, 128, 8
        $region36: #{tpu_custom_call.1} parent=31 // pred_fallthru
          _
      $region32: #{tpu_custom_call.1} parent=5 // pred_fallthru
        _
      %p226 = scmp.le.s32.totalorder 1, %s18
      %p227 = scmp.lt.s32.totalorder %s18, 3
      %p228 = pnand %p226, %p227
      %p229 = pneg %p228
      // Predicated region
      $region37: #{tpu_custom_call.1} parent=5 // pred_check
        _
      $region38: #{tpu_custom_call.1} parent=5 // pred_check_branch
        %231 = sbr.rel (%p228) target = $region40
      $region39: #{tpu_custom_call.1} parent=5 // pred_region
        %s232 = ssub.s32 %s18, 1
        %s233 = sand.u32 %s31, 1
        %s234 = scalar_lea.sflag [#allocation3], %s233
        %s235 = sand.u32 %s31, 1
        %s236 = smul.addr %s235, 16
        %s237 = scalar_lea.vmem [#allocation2], %s236
        // Predicated region
        $region41: #{tpu_custom_call.1} parent=39 // pred_check
          %p238 = pneg %p44
        $region42: #{tpu_custom_call.1} parent=39 // pred_check_branch
          %240 = sbr.rel (%p238) target = $region44
        $region43: #{tpu_custom_call.1} parent=39 // pred_region
          %241 = dma.done %s234, 256
        $region44: #{tpu_custom_call.1} parent=39 // pred_fallthru
          _
        // Predicated region
        $region45: #{tpu_custom_call.1} parent=39 // pred_check
          %p242 = pneg %p65
        $region46: #{tpu_custom_call.1} parent=39 // pred_check_branch
          %244 = sbr.rel (%p242) target = $region48
        $region47: #{tpu_custom_call.1} parent=39 // pred_region
          %245 = dma.done [#allocation6], 18432
        $region48: #{tpu_custom_call.1} parent=39 // pred_fallthru
          _
        // Predicated region
        $region49: #{tpu_custom_call.1} parent=39 // pred_check
          %p246 = pneg %p107
        $region50: #{tpu_custom_call.1} parent=39 // pred_check_branch
          %248 = sbr.rel (%p246) target = $region52
        $region51: #{tpu_custom_call.1} parent=39 // pred_region
          %249 = dma.done [#allocation6], 18432
        $region52: #{tpu_custom_call.1} parent=39 // pred_fallthru
          _
        %s250 = sand.u32 %s31, 1
        %s251 = scalar_lea.sflag [#allocation3], %s250
        %s252 = sand.u32 %s31, 1
        %s253 = smul.addr %s252, 16
        %s254 = scalar_lea.vmem [#allocation2], %s253
        %p255 = pneg %p44
        %p256 = pneg %p41
        %p257 = pneg %p65
        %p258 = pneg %p62
        %p259 = pneg %p86
        %p260 = pneg %p83
        %p261 = pneg %p107
        %p262 = pneg %p104
        %p263 = pneg %p128
        %p264 = pneg %p125
        %p265 = pneg %p154
        %p266 = pneg %p151
        %s267 = sand.u32 %s141, 1
        %s268 = scalar_lea.sflag [#allocation4], %s267
        %s269 = sand.u32 %s141, 1
        %s270 = smul.addr %s269, 16
        %s271 = scalar_lea.vmem [#allocation8], %s270
        %v272 = vld [vmem:[%s237] sm:$0xff]
        %v273 = vld [vmem:[%s237 + $0x8] sm:$0xff]
        %vm276 = vcmask 1040384
        %v277 = vrot.slane %v272, 7
        %v278 = vrot.slane %v273, 7
        %v279 = vsel %vm276, %v277, %v278
        %v282 = vsel %vm276, 0.0, %v277
        %283 = vrot.lane.b32.xlu0 %v282, 8
        %v284 = vpop.permute.xlu0 %283
        %285 = vrot.lane.b32.xlu0 %v279, 8
        %v286 = vpop.permute.xlu0 %285
        %287 = vrot.lane.b32.xlu0 %v282, 120
        %v288 = vpop.permute.xlu0 %287
        %289 = vrot.lane.b32.xlu0 %v279, 120
        %v290 = vpop.permute.xlu0 %289
        %291 = vrot.lane.b32.xlu0 %v272, 8
        %v292 = vpop.permute.xlu0 %291
        %293 = vrot.lane.b32.xlu0 %v273, 8
        %v294 = vpop.permute.xlu0 %293
        %295 = vrot.lane.b32.xlu0 %v272, 120
        %v296 = vpop.permute.xlu0 %295
        %297 = vrot.lane.b32.xlu0 %v273, 120
        %v298 = vpop.permute.xlu0 %297
        %vm299 = vcmask 1046528
        %v300 = vrot.slane %v272, 1
        %v301 = vrot.slane %v273, 1
        %v302 = vsel %vm299, %v300, %v301
        %v305 = vsel %vm299, %v301, 0.0
        %306 = vrot.lane.b32.xlu0 %v302, 8
        %v307 = vpop.permute.xlu0 %306
        %308 = vrot.lane.b32.xlu0 %v305, 8
        %v309 = vpop.permute.xlu0 %308
        %310 = vrot.lane.b32.xlu0 %v302, 120
        %v311 = vpop.permute.xlu0 %310
        %312 = vrot.lane.b32.xlu0 %v305, 120
        %v313 = vpop.permute.xlu0 %312
        %v314 = vld [vmem:[#allocation5] sm:$0xff]
        %v315 = vld [vmem:[#allocation5 + $0x8] sm:$0xff]
        %v316 = vld [vmem:[#allocation5 + $0x10] sm:$0xff]
        %v317 = vld [vmem:[#allocation5 + $0x18] sm:$0xff]
        %v318 = vld [vmem:[#allocation5 + $0x20] sm:$0xff]
        %v319 = vld [vmem:[#allocation5 + $0x28] sm:$0xff]
        %v320 = vld [vmem:[#allocation5 + $0x30] sm:$0xff]
        %v321 = vld [vmem:[#allocation5 + $0x38] sm:$0xff]
        %v322 = vld [vmem:[#allocation5 + $0x40] sm:$0xff]
        %v323 = vld [vmem:[#allocation5 + $0x48] sm:$0xff]
        %v324 = vld [vmem:[#allocation5 + $0x50] sm:$0xff]
        %v325 = vld [vmem:[#allocation5 + $0x58] sm:$0xff]
        %v326 = vld [vmem:[#allocation5 + $0x60] sm:$0xff]
        %v327 = vld [vmem:[#allocation5 + $0x68] sm:$0xff]
        %v328 = vld [vmem:[#allocation5 + $0x70] sm:$0xff]
        %v329 = vld [vmem:[#allocation5 + $0x78] sm:$0xff]
        %v330 = vld [vmem:[#allocation5 + $0x80] sm:$0xff]
        %v331 = vld [vmem:[#allocation5 + $0x88] sm:$0xff]
        %v332 = vld [vmem:[#allocation5 + $0x90] sm:$0xff]
        %v333 = vld [vmem:[#allocation5 + $0x98] sm:$0xff]
        %v334 = vld [vmem:[#allocation5 + $0xa0] sm:$0xff]
        %v335 = vld [vmem:[#allocation5 + $0xa8] sm:$0xff]
        %v336 = vld [vmem:[#allocation5 + $0xb0] sm:$0xff]
        %v337 = vld [vmem:[#allocation5 + $0xb8] sm:$0xff]
        %v338 = vld [vmem:[#allocation5 + $0xc0] sm:$0xff]
        %v339 = vld [vmem:[#allocation5 + $0xc8] sm:$0xff]
        %v340 = vld [vmem:[#allocation5 + $0xd0] sm:$0xff]
        %v341 = vld [vmem:[#allocation5 + $0xd8] sm:$0xff]
        %v342 = vld [vmem:[#allocation5 + $0xe0] sm:$0xff]
        %v343 = vld [vmem:[#allocation5 + $0xe8] sm:$0xff]
        %v344 = vld [vmem:[#allocation5 + $0xf0] sm:$0xff]
        %v345 = vld [vmem:[#allocation5 + $0xf8] sm:$0xff]
        %v346 = vld [vmem:[#allocation5 + $0x100] sm:$0xff]
        %v347 = vld [vmem:[#allocation5 + $0x108] sm:$0xff]
        %v348 = vld [vmem:[#allocation5 + $0x110] sm:$0xff]
        %v349 = vld [vmem:[#allocation5 + $0x118] sm:$0xff]
        %v350 = vld [vmem:[#allocation5 + $0x120] sm:$0xff]
        %v351 = vld [vmem:[#allocation5 + $0x128] sm:$0xff]
        %v352 = vld [vmem:[#allocation5 + $0x130] sm:$0xff]
        %v353 = vld [vmem:[#allocation5 + $0x138] sm:$0xff]
        %v354 = vld [vmem:[#allocation5 + $0x140] sm:$0xff]
        %v355 = vld [vmem:[#allocation5 + $0x148] sm:$0xff]
        %v356 = vld [vmem:[#allocation5 + $0x150] sm:$0xff]
        %v357 = vld [vmem:[#allocation5 + $0x158] sm:$0xff]
        %v358 = vld [vmem:[#allocation5 + $0x160] sm:$0xff]
        %v359 = vld [vmem:[#allocation5 + $0x168] sm:$0xff]
        %v360 = vld [vmem:[#allocation5 + $0x170] sm:$0xff]
        %v361 = vld [vmem:[#allocation5 + $0x178] sm:$0xff]
        %v362 = vld [vmem:[#allocation5 + $0x180] sm:$0xff]
        %v363 = vld [vmem:[#allocation5 + $0x188] sm:$0xff]
        %v364 = vld [vmem:[#allocation5 + $0x190] sm:$0xff]
        %v365 = vld [vmem:[#allocation5 + $0x198] sm:$0xff]
        %v366 = vld [vmem:[#allocation5 + $0x1a0] sm:$0xff]
        %v367 = vld [vmem:[#allocation5 + $0x1a8] sm:$0xff]
        %v368 = vld [vmem:[#allocation5 + $0x1b0] sm:$0xff]
        %v369 = vld [vmem:[#allocation5 + $0x1b8] sm:$0xff]
        %v370 = vld [vmem:[#allocation5 + $0x1c0] sm:$0xff]
        %v371 = vld [vmem:[#allocation5 + $0x1c8] sm:$0xff]
        %v372 = vld [vmem:[#allocation5 + $0x1d0] sm:$0xff]
        %v373 = vld [vmem:[#allocation5 + $0x1d8] sm:$0xff]
        %v374 = vld [vmem:[#allocation5 + $0x1e0] sm:$0xff]
        %v375 = vld [vmem:[#allocation5 + $0x1e8] sm:$0xff]
        %v376 = vld [vmem:[#allocation5 + $0x1f0] sm:$0xff]
        %v377 = vld [vmem:[#allocation5 + $0x1f8] sm:$0xff]
        %v378 = vld [vmem:[#allocation5 + $0x200] sm:$0xff]
        %v379 = vld [vmem:[#allocation5 + $0x208] sm:$0xff]
        %v380 = vld [vmem:[#allocation5 + $0x210] sm:$0xff]
        %v381 = vld [vmem:[#allocation5 + $0x218] sm:$0xff]
        %v382 = vld [vmem:[#allocation5 + $0x220] sm:$0xff]
        %v383 = vld [vmem:[#allocation5 + $0x228] sm:$0xff]
        %v384 = vld [vmem:[#allocation5 + $0x230] sm:$0xff]
        %v385 = vld [vmem:[#allocation5 + $0x238] sm:$0xff]
        %v386 = vld [vmem:[#allocation5 + $0x240] sm:$0xff]
        %v387 = vld [vmem:[#allocation5 + $0x248] sm:$0xff]
        %v388 = vld [vmem:[#allocation5 + $0x250] sm:$0xff]
        %v389 = vld [vmem:[#allocation5 + $0x258] sm:$0xff]
        %v390 = vld [vmem:[#allocation5 + $0x260] sm:$0xff]
        %v391 = vld [vmem:[#allocation5 + $0x268] sm:$0xff]
        %v392 = vld [vmem:[#allocation5 + $0x270] sm:$0xff]
        %v393 = vld [vmem:[#allocation5 + $0x278] sm:$0xff]
        %v394 = vld [vmem:[#allocation5 + $0x280] sm:$0xff]
        %v395 = vld [vmem:[#allocation5 + $0x288] sm:$0xff]
        %v396 = vld [vmem:[#allocation5 + $0x290] sm:$0xff]
        %v397 = vld [vmem:[#allocation5 + $0x298] sm:$0xff]
        %v398 = vld [vmem:[#allocation5 + $0x2a0] sm:$0xff]
        %v399 = vld [vmem:[#allocation5 + $0x2a8] sm:$0xff]
        %v400 = vld [vmem:[#allocation5 + $0x2b0] sm:$0xff]
        %v401 = vld [vmem:[#allocation5 + $0x2b8] sm:$0xff]
        %v402 = vld [vmem:[#allocation5 + $0x2c0] sm:$0xff]
        %v403 = vld [vmem:[#allocation5 + $0x2c8] sm:$0xff]
        %v404 = vld [vmem:[#allocation5 + $0x2d0] sm:$0xff]
        %v405 = vld [vmem:[#allocation5 + $0x2d8] sm:$0xff]
        %v406 = vld [vmem:[#allocation5 + $0x2e0] sm:$0xff]
        %v407 = vld [vmem:[#allocation5 + $0x2e8] sm:$0xff]
        %v408 = vld [vmem:[#allocation5 + $0x2f0] sm:$0xff]
        %v409 = vld [vmem:[#allocation5 + $0x2f8] sm:$0xff]
        %v410 = vld [vmem:[#allocation5 + $0x300] sm:$0xff]
        %v411 = vld [vmem:[#allocation5 + $0x308] sm:$0xff]
        %v412 = vld [vmem:[#allocation5 + $0x310] sm:$0xff]
        %v413 = vld [vmem:[#allocation5 + $0x318] sm:$0xff]
        %v414 = vld [vmem:[#allocation5 + $0x320] sm:$0xff]
        %v415 = vld [vmem:[#allocation5 + $0x328] sm:$0xff]
        %v416 = vld [vmem:[#allocation5 + $0x330] sm:$0xff]
        %v417 = vld [vmem:[#allocation5 + $0x338] sm:$0xff]
        %v418 = vld [vmem:[#allocation5 + $0x340] sm:$0xff]
        %v419 = vld [vmem:[#allocation5 + $0x348] sm:$0xff]
        %v420 = vld [vmem:[#allocation5 + $0x350] sm:$0xff]
        %v421 = vld [vmem:[#allocation5 + $0x358] sm:$0xff]
        %v422 = vld [vmem:[#allocation5 + $0x360] sm:$0xff]
        %v423 = vld [vmem:[#allocation5 + $0x368] sm:$0xff]
        %v424 = vld [vmem:[#allocation5 + $0x370] sm:$0xff]
        %v425 = vld [vmem:[#allocation5 + $0x378] sm:$0xff]
        %v426 = vld [vmem:[#allocation5 + $0x380] sm:$0xff]
        %v427 = vld [vmem:[#allocation5 + $0x388] sm:$0xff]
        %v428 = vld [vmem:[#allocation5 + $0x390] sm:$0xff]
        %v429 = vld [vmem:[#allocation5 + $0x398] sm:$0xff]
        %v430 = vld [vmem:[#allocation5 + $0x3a0] sm:$0xff]
        %v431 = vld [vmem:[#allocation5 + $0x3a8] sm:$0xff]
        %v432 = vld [vmem:[#allocation5 + $0x3b0] sm:$0xff]
        %v433 = vld [vmem:[#allocation5 + $0x3b8] sm:$0xff]
        %v434 = vld [vmem:[#allocation5 + $0x3c0] sm:$0xff]
        %v435 = vld [vmem:[#allocation5 + $0x3c8] sm:$0xff]
        %v436 = vld [vmem:[#allocation5 + $0x3d0] sm:$0xff]
        %v437 = vld [vmem:[#allocation5 + $0x3d8] sm:$0xff]
        %v438 = vld [vmem:[#allocation5 + $0x3e0] sm:$0xff]
        %v439 = vld [vmem:[#allocation5 + $0x3e8] sm:$0xff]
        %v440 = vld [vmem:[#allocation5 + $0x3f0] sm:$0xff]
        %v441 = vld [vmem:[#allocation5 + $0x3f8] sm:$0xff]
        %v442 = vld [vmem:[#allocation5 + $0x400] sm:$0xff]
        %v443 = vld [vmem:[#allocation5 + $0x408] sm:$0xff]
        %v444 = vld [vmem:[#allocation5 + $0x410] sm:$0xff]
        %v445 = vld [vmem:[#allocation5 + $0x418] sm:$0xff]
        %v446 = vld [vmem:[#allocation5 + $0x420] sm:$0xff]
        %v447 = vld [vmem:[#allocation5 + $0x428] sm:$0xff]
        %v448 = vld [vmem:[#allocation5 + $0x430] sm:$0xff]
        %v449 = vld [vmem:[#allocation5 + $0x438] sm:$0xff]
        %v450 = vld [vmem:[#allocation5 + $0x440] sm:$0xff]
        %v451 = vld [vmem:[#allocation5 + $0x448] sm:$0xff]
        %v452 = vld [vmem:[#allocation5 + $0x450] sm:$0xff]
        %v453 = vld [vmem:[#allocation5 + $0x458] sm:$0xff]
        %v454 = vld [vmem:[#allocation5 + $0x460] sm:$0xff]
        %v455 = vld [vmem:[#allocation5 + $0x468] sm:$0xff]
        %v456 = vld [vmem:[#allocation5 + $0x470] sm:$0xff]
        %v457 = vld [vmem:[#allocation5 + $0x478] sm:$0xff]
        %v458 = vld [vmem:[%s2] sm:$0x1]
        %v460 = vlaneseq
        %v461 = vshrl.u32 %v460, 7
        %v462 = vsub.s32 0, %v461
        %v463 = vrot.slane %v458, %v462
        %465 = vmatprep.subr.mxu0 0.0
        %466 = vmatpush1.msra.mxu0 %v314
        %467 = vmatprep.subr.mxu0 0.0
        %468 = vmatpush1.msra.mxu0 %v315
        %469 = vmatprep.subr.mxu0 0.0
        %470 = vmatpush1.msra.mxu0 %v316
        %471 = vmatprep.subr.mxu0 0.0
        %472 = vmatpush1.msra.mxu0 %v317
        %473 = vmatprep.subr.mxu0 0.0
        %474 = vmatpush1.msra.mxu0 %v318
        %475 = vmatprep.subr.mxu0 0.0
        %476 = vmatpush1.msra.mxu0 %v319
        %477 = vmatprep.subr.mxu0 0.0
        %478 = vmatpush1.msra.mxu0 %v320
        %479 = vmatprep.subr.mxu0 0.0
        %480 = vmatpush1.msra.mxu0 %v321
        %481 = vmatprep.subr.mxu0 0.0
        %482 = vmatpush1.msra.mxu0 %v322
        %483 = vmatprep.subr.mxu0 0.0
        %484 = vmatpush1.msra.mxu0 %v323
        %485 = vmatprep.subr.mxu0 0.0
        %486 = vmatpush1.msra.mxu0 %v324
        %487 = vmatprep.subr.mxu0 0.0
        %488 = vmatpush1.msra.mxu0 %v325
        %489 = vmatprep.subr.mxu0 0.0
        %490 = vmatpush1.msra.mxu0 %v326
        %491 = vmatprep.subr.mxu0 0.0
        %492 = vmatpush1.msra.mxu0 %v327
        %493 = vmatprep.subr.mxu0 0.0
        %494 = vmatpush1.msra.mxu0 %v328
        %495 = vmatprep.subr.mxu0 0.0
        %496 = vmatpush1.msra.mxu0 %v329
        %497 = vmatprep.subr.mxu0 0.0
        %498 = vmatpush1.msra.mxu0 %v330
        %499 = vmatprep.subr.mxu0 0.0
        %500 = vmatpush1.msra.mxu0 %v331
        %501 = vmatprep.subr.mxu0 0.0
        %502 = vmatpush1.msra.mxu0 %v332
        %503 = vmatprep.subr.mxu0 0.0
        %504 = vmatpush1.msra.mxu0 %v333
        %505 = vmatprep.subr.mxu0 0.0
        %506 = vmatpush1.msra.mxu0 %v334
        %507 = vmatprep.subr.mxu0 0.0
        %508 = vmatpush1.msra.mxu0 %v335
        %509 = vmatprep.subr.mxu0 0.0
        %510 = vmatpush1.msra.mxu0 %v336
        %511 = vmatprep.subr.mxu0 0.0
        %512 = vmatpush1.msra.mxu0 %v337
        %513 = vmatprep.subr.mxu0 0.0
        %514 = vmatpush1.msra.mxu0 %v338
        %515 = vmatprep.subr.mxu0 0.0
        %516 = vmatpush1.msra.mxu0 %v339
        %517 = vmatprep.subr.mxu0 0.0
        %518 = vmatpush1.msra.mxu0 %v340
        %519 = vmatprep.subr.mxu0 0.0
        %520 = vmatpush1.msra.mxu0 %v341
        %521 = vmatprep.subr.mxu0 0.0
        %522 = vmatpush1.msra.mxu0 %v342
        %523 = vmatprep.subr.mxu0 0.0
        %524 = vmatpush1.msra.mxu0 %v343
        %525 = vmatprep.subr.mxu0 0.0
        %526 = vmatpush1.msra.mxu0 %v344
        %527 = vmatprep.subr.mxu0 0.0
        %528 = vmatpush1.msra.mxu0 %v345
        %529 = vmatprep.mubr.f32.mxu0 %v282
        %530 = vmatmul.mubr.f32.gmra.mrb[0].mxu0 %v284
        %v531 = vpop.f32.mrb[0].mxu0
        %v532 = vadd.f32 %v463, %v531
        %v533 = vpop.f32.mrb[0].mxu0
        %534 = vmatprep.mubr.f32.mxu0 %v279
        %535 = vmatmul.mubr.f32.gmra.mrb[0].mxu0 %v286
        %v536 = vpop.f32.mrb[0].mxu0
        %v537 = vadd.f32 %v463, %v536
        %v538 = vpop.f32.mrb[0].mxu0
        %539 = vdwg.mxu0
        %540 = vmatprep.subr.mxu0 0.0
        %541 = vmatpush1.msra.mxu0 %v346
        %542 = vmatprep.subr.mxu0 0.0
        %543 = vmatpush1.msra.mxu0 %v347
        %544 = vmatprep.subr.mxu0 0.0
        %545 = vmatpush1.msra.mxu0 %v348
        %546 = vmatprep.subr.mxu0 0.0
        %547 = vmatpush1.msra.mxu0 %v349
        %548 = vmatprep.subr.mxu0 0.0
        %549 = vmatpush1.msra.mxu0 %v350
        %550 = vmatprep.subr.mxu0 0.0
        %551 = vmatpush1.msra.mxu0 %v351
        %552 = vmatprep.subr.mxu0 0.0
        %553 = vmatpush1.msra.mxu0 %v352
        %554 = vmatprep.subr.mxu0 0.0
        %555 = vmatpush1.msra.mxu0 %v353
        %556 = vmatprep.subr.mxu0 0.0
        %557 = vmatpush1.msra.mxu0 %v354
        %558 = vmatprep.subr.mxu0 0.0
        %559 = vmatpush1.msra.mxu0 %v355
        %560 = vmatprep.subr.mxu0 0.0
        %561 = vmatpush1.msra.mxu0 %v356
        %562 = vmatprep.subr.mxu0 0.0
        %563 = vmatpush1.msra.mxu0 %v357
        %564 = vmatprep.subr.mxu0 0.0
        %565 = vmatpush1.msra.mxu0 %v358
        %566 = vmatprep.subr.mxu0 0.0
        %567 = vmatpush1.msra.mxu0 %v359
        %568 = vmatprep.subr.mxu0 0.0
        %569 = vmatpush1.msra.mxu0 %v360
        %570 = vmatprep.subr.mxu0 0.0
        %571 = vmatpush1.msra.mxu0 %v361
        %572 = vmatprep.subr.mxu0 0.0
        %573 = vmatpush1.msra.mxu0 %v362
        %574 = vmatprep.subr.mxu0 0.0
        %575 = vmatpush1.msra.mxu0 %v363
        %576 = vmatprep.subr.mxu0 0.0
        %577 = vmatpush1.msra.mxu0 %v364
        %578 = vmatprep.subr.mxu0 0.0
        %579 = vmatpush1.msra.mxu0 %v365
        %580 = vmatprep.subr.mxu0 0.0
        %581 = vmatpush1.msra.mxu0 %v366
        %582 = vmatprep.subr.mxu0 0.0
        %583 = vmatpush1.msra.mxu0 %v367
        %584 = vmatprep.subr.mxu0 0.0
        %585 = vmatpush1.msra.mxu0 %v368
        %586 = vmatprep.subr.mxu0 0.0
        %587 = vmatpush1.msra.mxu0 %v369
        %588 = vmatprep.subr.mxu0 0.0
        %589 = vmatpush1.msra.mxu0 %v370
        %590 = vmatprep.subr.mxu0 0.0
        %591 = vmatpush1.msra.mxu0 %v371
        %592 = vmatprep.subr.mxu0 0.0
        %593 = vmatpush1.msra.mxu0 %v372
        %594 = vmatprep.subr.mxu0 0.0
        %595 = vmatpush1.msra.mxu0 %v373
        %596 = vmatprep.subr.mxu0 0.0
        %597 = vmatpush1.msra.mxu0 %v374
        %598 = vmatprep.subr.mxu0 0.0
        %599 = vmatpush1.msra.mxu0 %v375
        %600 = vmatprep.subr.mxu0 0.0
        %601 = vmatpush1.msra.mxu0 %v376
        %602 = vmatprep.subr.mxu0 0.0
        %603 = vmatpush1.msra.mxu0 %v377
        %604 = vmatprep.mubr.f32.mxu0 %v292
        %605 = vmatmul.mubr.f32.gmra.mrb[0].mxu0 %v288
        %v606 = vpop.f32.mrb[0].mxu0
        %v607 = vadd.f32 %v532, %v606
        %v608 = vpop.f32.mrb[0].mxu0
        %609 = vmatprep.mubr.f32.mxu0 %v294
        %610 = vmatmul.mubr.f32.gmra.mrb[0].mxu0 %v290
        %v611 = vpop.f32.mrb[0].mxu0
        %v612 = vadd.f32 %v537, %v611
        %v613 = vpop.f32.mrb[0].mxu0
        %614 = vdwg.mxu0
        %615 = vmatprep.subr.mxu0 0.0
        %616 = vmatpush1.msra.mxu0 %v378
        %617 = vmatprep.subr.mxu0 0.0
        %618 = vmatpush1.msra.mxu0 %v379
        %619 = vmatprep.subr.mxu0 0.0
        %620 = vmatpush1.msra.mxu0 %v380
        %621 = vmatprep.subr.mxu0 0.0
        %622 = vmatpush1.msra.mxu0 %v381
        %623 = vmatprep.subr.mxu0 0.0
        %624 = vmatpush1.msra.mxu0 %v382
        %625 = vmatprep.subr.mxu0 0.0
        %626 = vmatpush1.msra.mxu0 %v383
        %627 = vmatprep.subr.mxu0 0.0
        %628 = vmatpush1.msra.mxu0 %v384
        %629 = vmatprep.subr.mxu0 0.0
        %630 = vmatpush1.msra.mxu0 %v385
        %631 = vmatprep.subr.mxu0 0.0
        %632 = vmatpush1.msra.mxu0 %v386
        %633 = vmatprep.subr.mxu0 0.0
        %634 = vmatpush1.msra.mxu0 %v387
        %635 = vmatprep.subr.mxu0 0.0
        %636 = vmatpush1.msra.mxu0 %v388
        %637 = vmatprep.subr.mxu0 0.0
        %638 = vmatpush1.msra.mxu0 %v389
        %639 = vmatprep.subr.mxu0 0.0
        %640 = vmatpush1.msra.mxu0 %v390
        %641 = vmatprep.subr.mxu0 0.0
        %642 = vmatpush1.msra.mxu0 %v391
        %643 = vmatprep.subr.mxu0 0.0
        %644 = vmatpush1.msra.mxu0 %v392
        %645 = vmatprep.subr.mxu0 0.0
        %646 = vmatpush1.msra.mxu0 %v393
        %647 = vmatprep.subr.mxu0 0.0
        %648 = vmatpush1.msra.mxu0 %v394
        %649 = vmatprep.subr.mxu0 0.0
        %650 = vmatpush1.msra.mxu0 %v395
        %651 = vmatprep.subr.mxu0 0.0
        %652 = vmatpush1.msra.mxu0 %v396
        %653 = vmatprep.subr.mxu0 0.0
        %654 = vmatpush1.msra.mxu0 %v397
        %655 = vmatprep.subr.mxu0 0.0
        %656 = vmatpush1.msra.mxu0 %v398
        %657 = vmatprep.subr.mxu0 0.0
        %658 = vmatpush1.msra.mxu0 %v399
        %659 = vmatprep.subr.mxu0 0.0
        %660 = vmatpush1.msra.mxu0 %v400
        %661 = vmatprep.subr.mxu0 0.0
        %662 = vmatpush1.msra.mxu0 %v401
        %663 = vmatprep.subr.mxu0 0.0
        %664 = vmatpush1.msra.mxu0 %v402
        %665 = vmatprep.subr.mxu0 0.0
        %666 = vmatpush1.msra.mxu0 %v403
        %667 = vmatprep.subr.mxu0 0.0
        %668 = vmatpush1.msra.mxu0 %v404
        %669 = vmatprep.subr.mxu0 0.0
        %670 = vmatpush1.msra.mxu0 %v405
        %671 = vmatprep.subr.mxu0 0.0
        %672 = vmatpush1.msra.mxu0 %v406
        %673 = vmatprep.subr.mxu0 0.0
        %674 = vmatpush1.msra.mxu0 %v407
        %675 = vmatprep.subr.mxu0 0.0
        %676 = vmatpush1.msra.mxu0 %v408
        %677 = vmatprep.subr.mxu0 0.0
        %678 = vmatpush1.msra.mxu0 %v409
        %679 = vmatprep.mubr.f32.mxu0 %v296
        %680 = vmatmul.mubr.f32.gmra.mrb[0].mxu0 %v272
        %v681 = vpop.f32.mrb[0].mxu0
        %v682 = vadd.f32 %v607, %v681
        %v683 = vpop.f32.mrb[0].mxu0
        %684 = vmatprep.mubr.f32.mxu0 %v298
        %685 = vmatmul.mubr.f32.gmra.mrb[0].mxu0 %v273
        %v686 = vpop.f32.mrb[0].mxu0
        %v687 = vadd.f32 %v612, %v686
        %v688 = vpop.f32.mrb[0].mxu0
        %689 = vdwg.mxu0
        %690 = vmatprep.subr.mxu0 0.0
        %691 = vmatpush1.msra.mxu0 %v410
        %692 = vmatprep.subr.mxu0 0.0
        %693 = vmatpush1.msra.mxu0 %v411
        %694 = vmatprep.subr.mxu0 0.0
        %695 = vmatpush1.msra.mxu0 %v412
        %696 = vmatprep.subr.mxu0 0.0
        %697 = vmatpush1.msra.mxu0 %v413
        %698 = vmatprep.subr.mxu0 0.0
        %699 = vmatpush1.msra.mxu0 %v414
        %700 = vmatprep.subr.mxu0 0.0
        %701 = vmatpush1.msra.mxu0 %v415
        %702 = vmatprep.subr.mxu0 0.0
        %703 = vmatpush1.msra.mxu0 %v416
        %704 = vmatprep.subr.mxu0 0.0
        %705 = vmatpush1.msra.mxu0 %v417
        %706 = vmatprep.subr.mxu0 0.0
        %707 = vmatpush1.msra.mxu0 %v418
        %708 = vmatprep.subr.mxu0 0.0
        %709 = vmatpush1.msra.mxu0 %v419
        %710 = vmatprep.subr.mxu0 0.0
        %711 = vmatpush1.msra.mxu0 %v420
        %712 = vmatprep.subr.mxu0 0.0
        %713 = vmatpush1.msra.mxu0 %v421
        %714 = vmatprep.subr.mxu0 0.0
        %715 = vmatpush1.msra.mxu0 %v422
        %716 = vmatprep.subr.mxu0 0.0
        %717 = vmatpush1.msra.mxu0 %v423
        %718 = vmatprep.subr.mxu0 0.0
        %719 = vmatpush1.msra.mxu0 %v424
        %720 = vmatprep.subr.mxu0 0.0
        %721 = vmatpush1.msra.mxu0 %v425
        %722 = vmatprep.subr.mxu0 0.0
        %723 = vmatpush1.msra.mxu0 %v426
        %724 = vmatprep.subr.mxu0 0.0
        %725 = vmatpush1.msra.mxu0 %v427
        %726 = vmatprep.subr.mxu0 0.0
        %727 = vmatpush1.msra.mxu0 %v428
        %728 = vmatprep.subr.mxu0 0.0
        %729 = vmatpush1.msra.mxu0 %v429
        %730 = vmatprep.subr.mxu0 0.0
        %731 = vmatpush1.msra.mxu0 %v430
        %732 = vmatprep.subr.mxu0 0.0
        %733 = vmatpush1.msra.mxu0 %v431
        %734 = vmatprep.subr.mxu0 0.0
        %735 = vmatpush1.msra.mxu0 %v432
        %736 = vmatprep.subr.mxu0 0.0
        %737 = vmatpush1.msra.mxu0 %v433
        %738 = vmatprep.subr.mxu0 0.0
        %739 = vmatpush1.msra.mxu0 %v434
        %740 = vmatprep.subr.mxu0 0.0
        %741 = vmatpush1.msra.mxu0 %v435
        %742 = vmatprep.subr.mxu0 0.0
        %743 = vmatpush1.msra.mxu0 %v436
        %744 = vmatprep.subr.mxu0 0.0
        %745 = vmatpush1.msra.mxu0 %v437
        %746 = vmatprep.subr.mxu0 0.0
        %747 = vmatpush1.msra.mxu0 %v438
        %748 = vmatprep.subr.mxu0 0.0
        %749 = vmatpush1.msra.mxu0 %v439
        %750 = vmatprep.subr.mxu0 0.0
        %751 = vmatpush1.msra.mxu0 %v440
        %752 = vmatprep.subr.mxu0 0.0
        %753 = vmatpush1.msra.mxu0 %v441
        %754 = vmatprep.mubr.f32.mxu0 %v302
        %755 = vmatmul.mubr.f32.gmra.mrb[0].mxu0 %v307
        %v756 = vpop.f32.mrb[0].mxu0
        %v757 = vadd.f32 %v682, %v756
        %v758 = vpop.f32.mrb[0].mxu0
        %759 = vmatprep.mubr.f32.mxu0 %v305
        %760 = vmatmul.mubr.f32.gmra.mrb[0].mxu0 %v309
        %v761 = vpop.f32.mrb[0].mxu0
        %v762 = vadd.f32 %v687, %v761
        %v763 = vpop.f32.mrb[0].mxu0
        %764 = vdwg.mxu0
        %765 = vmatprep.subr.mxu0 0.0
        %766 = vmatpush1.msra.mxu0 %v442
        %767 = vmatprep.subr.mxu0 0.0
        %768 = vmatpush1.msra.mxu0 %v443
        %769 = vmatprep.subr.mxu0 0.0
        %770 = vmatpush1.msra.mxu0 %v444
        %771 = vmatprep.subr.mxu0 0.0
        %772 = vmatpush1.msra.mxu0 %v445
        %773 = vmatprep.subr.mxu0 0.0
        %774 = vmatpush1.msra.mxu0 %v446
        %775 = vmatprep.subr.mxu0 0.0
        %776 = vmatpush1.msra.mxu0 %v447
        %777 = vmatprep.subr.mxu0 0.0
        %778 = vmatpush1.msra.mxu0 %v448
        %779 = vmatprep.subr.mxu0 0.0
        %780 = vmatpush1.msra.mxu0 %v449
        %781 = vmatprep.subr.mxu0 0.0
        %782 = vmatpush1.msra.mxu0 %v450
        %783 = vmatprep.subr.mxu0 0.0
        %784 = vmatpush1.msra.mxu0 %v451
        %785 = vmatprep.subr.mxu0 0.0
        %786 = vmatpush1.msra.mxu0 %v452
        %787 = vmatprep.subr.mxu0 0.0
        %788 = vmatpush1.msra.mxu0 %v453
        %789 = vmatprep.subr.mxu0 0.0
        %790 = vmatpush1.msra.mxu0 %v454
        %791 = vmatprep.subr.mxu0 0.0
        %792 = vmatpush1.msra.mxu0 %v455
        %793 = vmatprep.subr.mxu0 0.0
        %794 = vmatpush1.msra.mxu0 %v456
        %795 = vmatprep.subr.mxu0 0.0
        %796 = vmatpush1.msra.mxu0 %v457
        %797 = vmatprep.subr.mxu0 0.0
        %798 = vmatpush1.msra.mxu0 0.0
        %799 = vmatprep.subr.mxu0 0.0
        %800 = vmatpush1.msra.mxu0 0.0
        %801 = vmatprep.subr.mxu0 0.0
        %802 = vmatpush1.msra.mxu0 0.0
        %803 = vmatprep.subr.mxu0 0.0
        %804 = vmatpush1.msra.mxu0 0.0
        %805 = vmatprep.subr.mxu0 0.0
        %806 = vmatpush1.msra.mxu0 0.0
        %807 = vmatprep.subr.mxu0 0.0
        %808 = vmatpush1.msra.mxu0 0.0
        %809 = vmatprep.subr.mxu0 0.0
        %810 = vmatpush1.msra.mxu0 0.0
        %811 = vmatprep.subr.mxu0 0.0
        %812 = vmatpush1.msra.mxu0 0.0
        %813 = vmatprep.subr.mxu0 0.0
        %814 = vmatpush1.msra.mxu0 0.0
        %815 = vmatprep.subr.mxu0 0.0
        %816 = vmatpush1.msra.mxu0 0.0
        %817 = vmatprep.subr.mxu0 0.0
        %818 = vmatpush1.msra.mxu0 0.0
        %819 = vmatprep.subr.mxu0 0.0
        %820 = vmatpush1.msra.mxu0 0.0
        %821 = vmatprep.subr.mxu0 0.0
        %822 = vmatpush1.msra.mxu0 0.0
        %823 = vmatprep.subr.mxu0 0.0
        %824 = vmatpush1.msra.mxu0 0.0
        %825 = vmatprep.subr.mxu0 0.0
        %826 = vmatpush1.msra.mxu0 0.0
        %827 = vmatprep.subr.mxu0 0.0
        %828 = vmatpush1.msra.mxu0 0.0
        %829 = vmatprep.mubr.f32.mxu0 0.0
        %830 = vmatmul.mubr.f32.gmra.mrb[0].mxu0 %v311
        %v831 = vpop.f32.mrb[0].mxu0
        %v832 = vadd.f32 %v757, %v831
        %v833 = vpop.f32.mrb[0].mxu0
        %834 = vmatprep.mubr.f32.mxu0 0.0
        %835 = vmatmul.mubr.f32.gmra.mrb[0].mxu0 %v313
        %v836 = vpop.f32.mrb[0].mxu0
        %v837 = vadd.f32 %v762, %v836
        %v838 = vpop.f32.mrb[0].mxu0
        %839 = vdwg.mxu0
        %v840 = vmax.f32 %v832, 0.0
        %v841 = vmax.f32 %v837, 0.0
        %v844 = vrot.slane %v840, 7
        %v845 = vrot.slane %v841, 7
        %v846 = vsel %vm276, %v844, %v845
        %v849 = vsel %vm276, 0.0, %v844
        %850 = vrot.lane.b32.xlu0 %v849, 8
        %v851 = vpop.permute.xlu0 %850
        %852 = vrot.lane.b32.xlu0 %v846, 8
        %v853 = vpop.permute.xlu0 %852
        %854 = vrot.lane.b32.xlu0 %v849, 120
        %v855 = vpop.permute.xlu0 %854
        %856 = vrot.lane.b32.xlu0 %v846, 120
        %v857 = vpop.permute.xlu0 %856
        %858 = vrot.lane.b32.xlu0 %v840, 8
        %v859 = vpop.permute.xlu0 %858
        %860 = vrot.lane.b32.xlu0 %v841, 8
        %v861 = vpop.permute.xlu0 %860
        %862 = vrot.lane.b32.xlu0 %v840, 120
        %v863 = vpop.permute.xlu0 %862
        %864 = vrot.lane.b32.xlu0 %v841, 120
        %v865 = vpop.permute.xlu0 %864
        %v866 = vrot.slane %v840, 1
        %v867 = vrot.slane %v841, 1
        %v868 = vsel %vm299, %v866, %v867
        %v871 = vsel %vm299, %v867, 0.0
        %872 = vrot.lane.b32.xlu0 %v868, 8
        %v873 = vpop.permute.xlu0 %872
        %874 = vrot.lane.b32.xlu0 %v871, 8
        %v875 = vpop.permute.xlu0 %874
        %876 = vrot.lane.b32.xlu0 %v868, 120
        %v877 = vpop.permute.xlu0 %876
        %878 = vrot.lane.b32.xlu0 %v871, 120
        %v879 = vpop.permute.xlu0 %878
        %v880 = vld [vmem:[#allocation7] sm:$0xff]
        %v881 = vld [vmem:[#allocation7 + $0x8] sm:$0xff]
        %v882 = vld [vmem:[#allocation7 + $0x10] sm:$0xff]
        %v883 = vld [vmem:[#allocation7 + $0x18] sm:$0xff]
        %v884 = vld [vmem:[#allocation7 + $0x20] sm:$0xff]
        %v885 = vld [vmem:[#allocation7 + $0x28] sm:$0xff]
        %v886 = vld [vmem:[#allocation7 + $0x30] sm:$0xff]
        %v887 = vld [vmem:[#allocation7 + $0x38] sm:$0xff]
        %v888 = vld [vmem:[#allocation7 + $0x40] sm:$0xff]
        %v889 = vld [vmem:[#allocation7 + $0x48] sm:$0xff]
        %v890 = vld [vmem:[#allocation7 + $0x50] sm:$0xff]
        %v891 = vld [vmem:[#allocation7 + $0x58] sm:$0xff]
        %v892 = vld [vmem:[#allocation7 + $0x60] sm:$0xff]
        %v893 = vld [vmem:[#allocation7 + $0x68] sm:$0xff]
        %v894 = vld [vmem:[#allocation7 + $0x70] sm:$0xff]
        %v895 = vld [vmem:[#allocation7 + $0x78] sm:$0xff]
        %v896 = vld [vmem:[#allocation7 + $0x80] sm:$0xff]
        %v897 = vld [vmem:[#allocation7 + $0x88] sm:$0xff]
        %v898 = vld [vmem:[#allocation7 + $0x90] sm:$0xff]
        %v899 = vld [vmem:[#allocation7 + $0x98] sm:$0xff]
        %v900 = vld [vmem:[#allocation7 + $0xa0] sm:$0xff]
        %v901 = vld [vmem:[#allocation7 + $0xa8] sm:$0xff]
        %v902 = vld [vmem:[#allocation7 + $0xb0] sm:$0xff]
        %v903 = vld [vmem:[#allocation7 + $0xb8] sm:$0xff]
        %v904 = vld [vmem:[#allocation7 + $0xc0] sm:$0xff]
        %v905 = vld [vmem:[#allocation7 + $0xc8] sm:$0xff]
        %v906 = vld [vmem:[#allocation7 + $0xd0] sm:$0xff]
        %v907 = vld [vmem:[#allocation7 + $0xd8] sm:$0xff]
        %v908 = vld [vmem:[#allocation7 + $0xe0] sm:$0xff]
        %v909 = vld [vmem:[#allocation7 + $0xe8] sm:$0xff]
        %v910 = vld [vmem:[#allocation7 + $0xf0] sm:$0xff]
        %v911 = vld [vmem:[#allocation7 + $0xf8] sm:$0xff]
        %v912 = vld [vmem:[#allocation7 + $0x100] sm:$0xff]
        %v913 = vld [vmem:[#allocation7 + $0x108] sm:$0xff]
        %v914 = vld [vmem:[#allocation7 + $0x110] sm:$0xff]
        %v915 = vld [vmem:[#allocation7 + $0x118] sm:$0xff]
        %v916 = vld [vmem:[#allocation7 + $0x120] sm:$0xff]
        %v917 = vld [vmem:[#allocation7 + $0x128] sm:$0xff]
        %v918 = vld [vmem:[#allocation7 + $0x130] sm:$0xff]
        %v919 = vld [vmem:[#allocation7 + $0x138] sm:$0xff]
        %v920 = vld [vmem:[#allocation7 + $0x140] sm:$0xff]
        %v921 = vld [vmem:[#allocation7 + $0x148] sm:$0xff]
        %v922 = vld [vmem:[#allocation7 + $0x150] sm:$0xff]
        %v923 = vld [vmem:[#allocation7 + $0x158] sm:$0xff]
        %v924 = vld [vmem:[#allocation7 + $0x160] sm:$0xff]
        %v925 = vld [vmem:[#allocation7 + $0x168] sm:$0xff]
        %v926 = vld [vmem:[#allocation7 + $0x170] sm:$0xff]
        %v927 = vld [vmem:[#allocation7 + $0x178] sm:$0xff]
        %v928 = vld [vmem:[#allocation7 + $0x180] sm:$0xff]
        %v929 = vld [vmem:[#allocation7 + $0x188] sm:$0xff]
        %v930 = vld [vmem:[#allocation7 + $0x190] sm:$0xff]
        %v931 = vld [vmem:[#allocation7 + $0x198] sm:$0xff]
        %v932 = vld [vmem:[#allocation7 + $0x1a0] sm:$0xff]
        %v933 = vld [vmem:[#allocation7 + $0x1a8] sm:$0xff]
        %v934 = vld [vmem:[#allocation7 + $0x1b0] sm:$0xff]
        %v935 = vld [vmem:[#allocation7 + $0x1b8] sm:$0xff]
        %v936 = vld [vmem:[#allocation7 + $0x1c0] sm:$0xff]
        %v937 = vld [vmem:[#allocation7 + $0x1c8] sm:$0xff]
        %v938 = vld [vmem:[#allocation7 + $0x1d0] sm:$0xff]
        %v939 = vld [vmem:[#allocation7 + $0x1d8] sm:$0xff]
        %v940 = vld [vmem:[#allocation7 + $0x1e0] sm:$0xff]
        %v941 = vld [vmem:[#allocation7 + $0x1e8] sm:$0xff]
        %v942 = vld [vmem:[#allocation7 + $0x1f0] sm:$0xff]
        %v943 = vld [vmem:[#allocation7 + $0x1f8] sm:$0xff]
        %v944 = vld [vmem:[#allocation7 + $0x200] sm:$0xff]
        %v945 = vld [vmem:[#allocation7 + $0x208] sm:$0xff]
        %v946 = vld [vmem:[#allocation7 + $0x210] sm:$0xff]
        %v947 = vld [vmem:[#allocation7 + $0x218] sm:$0xff]
        %v948 = vld [vmem:[#allocation7 + $0x220] sm:$0xff]
        %v949 = vld [vmem:[#allocation7 + $0x228] sm:$0xff]
        %v950 = vld [vmem:[#allocation7 + $0x230] sm:$0xff]
        %v951 = vld [vmem:[#allocation7 + $0x238] sm:$0xff]
        %v952 = vld [vmem:[#allocation7 + $0x240] sm:$0xff]
        %v953 = vld [vmem:[#allocation7 + $0x248] sm:$0xff]
        %v954 = vld [vmem:[#allocation7 + $0x250] sm:$0xff]
        %v955 = vld [vmem:[#allocation7 + $0x258] sm:$0xff]
        %v956 = vld [vmem:[#allocation7 + $0x260] sm:$0xff]
        %v957 = vld [vmem:[#allocation7 + $0x268] sm:$0xff]
        %v958 = vld [vmem:[#allocation7 + $0x270] sm:$0xff]
        %v959 = vld [vmem:[#allocation7 + $0x278] sm:$0xff]
        %v960 = vld [vmem:[#allocation7 + $0x280] sm:$0xff]
        %v961 = vld [vmem:[#allocation7 + $0x288] sm:$0xff]
        %v962 = vld [vmem:[#allocation7 + $0x290] sm:$0xff]
        %v963 = vld [vmem:[#allocation7 + $0x298] sm:$0xff]
        %v964 = vld [vmem:[#allocation7 + $0x2a0] sm:$0xff]
        %v965 = vld [vmem:[#allocation7 + $0x2a8] sm:$0xff]
        %v966 = vld [vmem:[#allocation7 + $0x2b0] sm:$0xff]
        %v967 = vld [vmem:[#allocation7 + $0x2b8] sm:$0xff]
        %v968 = vld [vmem:[#allocation7 + $0x2c0] sm:$0xff]
        %v969 = vld [vmem:[#allocation7 + $0x2c8] sm:$0xff]
        %v970 = vld [vmem:[#allocation7 + $0x2d0] sm:$0xff]
        %v971 = vld [vmem:[#allocation7 + $0x2d8] sm:$0xff]
        %v972 = vld [vmem:[#allocation7 + $0x2e0] sm:$0xff]
        %v973 = vld [vmem:[#allocation7 + $0x2e8] sm:$0xff]
        %v974 = vld [vmem:[#allocation7 + $0x2f0] sm:$0xff]
        %v975 = vld [vmem:[#allocation7 + $0x2f8] sm:$0xff]
        %v976 = vld [vmem:[#allocation7 + $0x300] sm:$0xff]
        %v977 = vld [vmem:[#allocation7 + $0x308] sm:$0xff]
        %v978 = vld [vmem:[#allocation7 + $0x310] sm:$0xff]
        %v979 = vld [vmem:[#allocation7 + $0x318] sm:$0xff]
        %v980 = vld [vmem:[#allocation7 + $0x320] sm:$0xff]
        %v981 = vld [vmem:[#allocation7 + $0x328] sm:$0xff]
        %v982 = vld [vmem:[#allocation7 + $0x330] sm:$0xff]
        %v983 = vld [vmem:[#allocation7 + $0x338] sm:$0xff]
        %v984 = vld [vmem:[#allocation7 + $0x340] sm:$0xff]
        %v985 = vld [vmem:[#allocation7 + $0x348] sm:$0xff]
        %v986 = vld [vmem:[#allocation7 + $0x350] sm:$0xff]
        %v987 = vld [vmem:[#allocation7 + $0x358] sm:$0xff]
        %v988 = vld [vmem:[#allocation7 + $0x360] sm:$0xff]
        %v989 = vld [vmem:[#allocation7 + $0x368] sm:$0xff]
        %v990 = vld [vmem:[#allocation7 + $0x370] sm:$0xff]
        %v991 = vld [vmem:[#allocation7 + $0x378] sm:$0xff]
        %v992 = vld [vmem:[#allocation7 + $0x380] sm:$0xff]
        %v993 = vld [vmem:[#allocation7 + $0x388] sm:$0xff]
        %v994 = vld [vmem:[#allocation7 + $0x390] sm:$0xff]
        %v995 = vld [vmem:[#allocation7 + $0x398] sm:$0xff]
        %v996 = vld [vmem:[#allocation7 + $0x3a0] sm:$0xff]
        %v997 = vld [vmem:[#allocation7 + $0x3a8] sm:$0xff]
        %v998 = vld [vmem:[#allocation7 + $0x3b0] sm:$0xff]
        %v999 = vld [vmem:[#allocation7 + $0x3b8] sm:$0xff]
        %v1000 = vld [vmem:[#allocation7 + $0x3c0] sm:$0xff]
        %v1001 = vld [vmem:[#allocation7 + $0x3c8] sm:$0xff]
        %v1002 = vld [vmem:[#allocation7 + $0x3d0] sm:$0xff]
        %v1003 = vld [vmem:[#allocation7 + $0x3d8] sm:$0xff]
        %v1004 = vld [vmem:[#allocation7 + $0x3e0] sm:$0xff]
        %v1005 = vld [vmem:[#allocation7 + $0x3e8] sm:$0xff]
        %v1006 = vld [vmem:[#allocation7 + $0x3f0] sm:$0xff]
        %v1007 = vld [vmem:[#allocation7 + $0x3f8] sm:$0xff]
        %v1008 = vld [vmem:[#allocation7 + $0x400] sm:$0xff]
        %v1009 = vld [vmem:[#allocation7 + $0x408] sm:$0xff]
        %v1010 = vld [vmem:[#allocation7 + $0x410] sm:$0xff]
        %v1011 = vld [vmem:[#allocation7 + $0x418] sm:$0xff]
        %v1012 = vld [vmem:[#allocation7 + $0x420] sm:$0xff]
        %v1013 = vld [vmem:[#allocation7 + $0x428] sm:$0xff]
        %v1014 = vld [vmem:[#allocation7 + $0x430] sm:$0xff]
        %v1015 = vld [vmem:[#allocation7 + $0x438] sm:$0xff]
        %v1016 = vld [vmem:[#allocation7 + $0x440] sm:$0xff]
        %v1017 = vld [vmem:[#allocation7 + $0x448] sm:$0xff]
        %v1018 = vld [vmem:[#allocation7 + $0x450] sm:$0xff]
        %v1019 = vld [vmem:[#allocation7 + $0x458] sm:$0xff]
        %v1020 = vld [vmem:[#allocation7 + $0x460] sm:$0xff]
        %v1021 = vld [vmem:[#allocation7 + $0x468] sm:$0xff]
        %v1022 = vld [vmem:[#allocation7 + $0x470] sm:$0xff]
        %v1023 = vld [vmem:[#allocation7 + $0x478] sm:$0xff]
        %v1024 = vld [vmem:[%s4] sm:$0x1]
        %v1026 = vlaneseq
        %v1027 = vshrl.u32 %v1026, 7
        %v1028 = vsub.s32 0, %v1027
        %v1029 = vrot.slane %v1024, %v1028
        %1031 = vmatprep.subr.mxu0 0.0
        %1032 = vmatpush1.msra.mxu0 %v880
        %1033 = vmatprep.subr.mxu0 0.0
        %1034 = vmatpush1.msra.mxu0 %v881
        %1035 = vmatprep.subr.mxu0 0.0
        %1036 = vmatpush1.msra.mxu0 %v882
        %1037 = vmatprep.subr.mxu0 0.0
        %1038 = vmatpush1.msra.mxu0 %v883
        %1039 = vmatprep.subr.mxu0 0.0
        %1040 = vmatpush1.msra.mxu0 %v884
        %1041 = vmatprep.subr.mxu0 0.0
        %1042 = vmatpush1.msra.mxu0 %v885
        %1043 = vmatprep.subr.mxu0 0.0
        %1044 = vmatpush1.msra.mxu0 %v886
        %1045 = vmatprep.subr.mxu0 0.0
        %1046 = vmatpush1.msra.mxu0 %v887
        %1047 = vmatprep.subr.mxu0 0.0
        %1048 = vmatpush1.msra.mxu0 %v888
        %1049 = vmatprep.subr.mxu0 0.0
        %1050 = vmatpush1.msra.mxu0 %v889
        %1051 = vmatprep.subr.mxu0 0.0
        %1052 = vmatpush1.msra.mxu0 %v890
        %1053 = vmatprep.subr.mxu0 0.0
        %1054 = vmatpush1.msra.mxu0 %v891
        %1055 = vmatprep.subr.mxu0 0.0
        %1056 = vmatpush1.msra.mxu0 %v892
        %1057 = vmatprep.subr.mxu0 0.0
        %1058 = vmatpush1.msra.mxu0 %v893
        %1059 = vmatprep.subr.mxu0 0.0
        %1060 = vmatpush1.msra.mxu0 %v894
        %1061 = vmatprep.subr.mxu0 0.0
        %1062 = vmatpush1.msra.mxu0 %v895
        %1063 = vmatprep.subr.mxu0 0.0
        %1064 = vmatpush1.msra.mxu0 %v896
        %1065 = vmatprep.subr.mxu0 0.0
        %1066 = vmatpush1.msra.mxu0 %v897
        %1067 = vmatprep.subr.mxu0 0.0
        %1068 = vmatpush1.msra.mxu0 %v898
        %1069 = vmatprep.subr.mxu0 0.0
        %1070 = vmatpush1.msra.mxu0 %v899
        %1071 = vmatprep.subr.mxu0 0.0
        %1072 = vmatpush1.msra.mxu0 %v900
        %1073 = vmatprep.subr.mxu0 0.0
        %1074 = vmatpush1.msra.mxu0 %v901
        %1075 = vmatprep.subr.mxu0 0.0
        %1076 = vmatpush1.msra.mxu0 %v902
        %1077 = vmatprep.subr.mxu0 0.0
        %1078 = vmatpush1.msra.mxu0 %v903
        %1079 = vmatprep.subr.mxu0 0.0
        %1080 = vmatpush1.msra.mxu0 %v904
        %1081 = vmatprep.subr.mxu0 0.0
        %1082 = vmatpush1.msra.mxu0 %v905
        %1083 = vmatprep.subr.mxu0 0.0
        %1084 = vmatpush1.msra.mxu0 %v906
        %1085 = vmatprep.subr.mxu0 0.0
        %1086 = vmatpush1.msra.mxu0 %v907
        %1087 = vmatprep.subr.mxu0 0.0
        %1088 = vmatpush1.msra.mxu0 %v908
        %1089 = vmatprep.subr.mxu0 0.0
        %1090 = vmatpush1.msra.mxu0 %v909
        %1091 = vmatprep.subr.mxu0 0.0
        %1092 = vmatpush1.msra.mxu0 %v910
        %1093 = vmatprep.subr.mxu0 0.0
        %1094 = vmatpush1.msra.mxu0 %v911
        %1095 = vmatprep.mubr.f32.mxu0 %v849
        %1096 = vmatmul.mubr.f32.gmra.mrb[0].mxu0 %v851
        %v1097 = vpop.f32.mrb[0].mxu0
        %v1098 = vadd.f32 %v1029, %v1097
        %v1099 = vpop.f32.mrb[0].mxu0
        %1100 = vmatprep.mubr.f32.mxu0 %v846
        %1101 = vmatmul.mubr.f32.gmra.mrb[0].mxu0 %v853
        %v1102 = vpop.f32.mrb[0].mxu0
        %v1103 = vadd.f32 %v1029, %v1102
        %v1104 = vpop.f32.mrb[0].mxu0
        %1105 = vdwg.mxu0
        %1106 = vmatprep.subr.mxu0 0.0
        %1107 = vmatpush1.msra.mxu0 %v912
        %1108 = vmatprep.subr.mxu0 0.0
        %1109 = vmatpush1.msra.mxu0 %v913
        %1110 = vmatprep.subr.mxu0 0.0
        %1111 = vmatpush1.msra.mxu0 %v914
        %1112 = vmatprep.subr.mxu0 0.0
        %1113 = vmatpush1.msra.mxu0 %v915
        %1114 = vmatprep.subr.mxu0 0.0
        %1115 = vmatpush1.msra.mxu0 %v916
        %1116 = vmatprep.subr.mxu0 0.0
        %1117 = vmatpush1.msra.mxu0 %v917
        %1118 = vmatprep.subr.mxu0 0.0
        %1119 = vmatpush1.msra.mxu0 %v918
        %1120 = vmatprep.subr.mxu0 0.0
        %1121 = vmatpush1.msra.mxu0 %v919
        %1122 = vmatprep.subr.mxu0 0.0
        %1123 = vmatpush1.msra.mxu0 %v920
        %1124 = vmatprep.subr.mxu0 0.0
        %1125 = vmatpush1.msra.mxu0 %v921
        %1126 = vmatprep.subr.mxu0 0.0
        %1127 = vmatpush1.msra.mxu0 %v922
        %1128 = vmatprep.subr.mxu0 0.0
        %1129 = vmatpush1.msra.mxu0 %v923
        %1130 = vmatprep.subr.mxu0 0.0
        %1131 = vmatpush1.msra.mxu0 %v924
        %1132 = vmatprep.subr.mxu0 0.0
        %1133 = vmatpush1.msra.mxu0 %v925
        %1134 = vmatprep.subr.mxu0 0.0
        %1135 = vmatpush1.msra.mxu0 %v926
        %1136 = vmatprep.subr.mxu0 0.0
        %1137 = vmatpush1.msra.mxu0 %v927
        %1138 = vmatprep.subr.mxu0 0.0
        %1139 = vmatpush1.msra.mxu0 %v928
        %1140 = vmatprep.subr.mxu0 0.0
        %1141 = vmatpush1.msra.mxu0 %v929
        %1142 = vmatprep.subr.mxu0 0.0
        %1143 = vmatpush1.msra.mxu0 %v930
        %1144 = vmatprep.subr.mxu0 0.0
        %1145 = vmatpush1.msra.mxu0 %v931
        %1146 = vmatprep.subr.mxu0 0.0
        %1147 = vmatpush1.msra.mxu0 %v932
        %1148 = vmatprep.subr.mxu0 0.0
        %1149 = vmatpush1.msra.mxu0 %v933
        %1150 = vmatprep.subr.mxu0 0.0
        %1151 = vmatpush1.msra.mxu0 %v934
        %1152 = vmatprep.subr.mxu0 0.0
        %1153 = vmatpush1.msra.mxu0 %v935
        %1154 = vmatprep.subr.mxu0 0.0
        %1155 = vmatpush1.msra.mxu0 %v936
        %1156 = vmatprep.subr.mxu0 0.0
        %1157 = vmatpush1.msra.mxu0 %v937
        %1158 = vmatprep.subr.mxu0 0.0
        %1159 = vmatpush1.msra.mxu0 %v938
        %1160 = vmatprep.subr.mxu0 0.0
        %1161 = vmatpush1.msra.mxu0 %v939
        %1162 = vmatprep.subr.mxu0 0.0
        %1163 = vmatpush1.msra.mxu0 %v940
        %1164 = vmatprep.subr.mxu0 0.0
        %1165 = vmatpush1.msra.mxu0 %v941
        %1166 = vmatprep.subr.mxu0 0.0
        %1167 = vmatpush1.msra.mxu0 %v942
        %1168 = vmatprep.subr.mxu0 0.0
        %1169 = vmatpush1.msra.mxu0 %v943
        %1170 = vmatprep.mubr.f32.mxu0 %v859
        %1171 = vmatmul.mubr.f32.gmra.mrb[0].mxu0 %v855
        %v1172 = vpop.f32.mrb[0].mxu0
        %v1173 = vadd.f32 %v1098, %v1172
        %v1174 = vpop.f32.mrb[0].mxu0
        %1175 = vmatprep.mubr.f32.mxu0 %v861
        %1176 = vmatmul.mubr.f32.gmra.mrb[0].mxu0 %v857
        %v1177 = vpop.f32.mrb[0].mxu0
        %v1178 = vadd.f32 %v1103, %v1177
        %v1179 = vpop.f32.mrb[0].mxu0
        %1180 = vdwg.mxu0
        %1181 = vmatprep.subr.mxu0 0.0
        %1182 = vmatpush1.msra.mxu0 %v944
        %1183 = vmatprep.subr.mxu0 0.0
        %1184 = vmatpush1.msra.mxu0 %v945
        %1185 = vmatprep.subr.mxu0 0.0
        %1186 = vmatpush1.msra.mxu0 %v946
        %1187 = vmatprep.subr.mxu0 0.0
        %1188 = vmatpush1.msra.mxu0 %v947
        %1189 = vmatprep.subr.mxu0 0.0
        %1190 = vmatpush1.msra.mxu0 %v948
        %1191 = vmatprep.subr.mxu0 0.0
        %1192 = vmatpush1.msra.mxu0 %v949
        %1193 = vmatprep.subr.mxu0 0.0
        %1194 = vmatpush1.msra.mxu0 %v950
        %1195 = vmatprep.subr.mxu0 0.0
        %1196 = vmatpush1.msra.mxu0 %v951
        %1197 = vmatprep.subr.mxu0 0.0
        %1198 = vmatpush1.msra.mxu0 %v952
        %1199 = vmatprep.subr.mxu0 0.0
        %1200 = vmatpush1.msra.mxu0 %v953
        %1201 = vmatprep.subr.mxu0 0.0
        %1202 = vmatpush1.msra.mxu0 %v954
        %1203 = vmatprep.subr.mxu0 0.0
        %1204 = vmatpush1.msra.mxu0 %v955
        %1205 = vmatprep.subr.mxu0 0.0
        %1206 = vmatpush1.msra.mxu0 %v956
        %1207 = vmatprep.subr.mxu0 0.0
        %1208 = vmatpush1.msra.mxu0 %v957
        %1209 = vmatprep.subr.mxu0 0.0
        %1210 = vmatpush1.msra.mxu0 %v958
        %1211 = vmatprep.subr.mxu0 0.0
        %1212 = vmatpush1.msra.mxu0 %v959
        %1213 = vmatprep.subr.mxu0 0.0
        %1214 = vmatpush1.msra.mxu0 %v960
        %1215 = vmatprep.subr.mxu0 0.0
        %1216 = vmatpush1.msra.mxu0 %v961
        %1217 = vmatprep.subr.mxu0 0.0
        %1218 = vmatpush1.msra.mxu0 %v962
        %1219 = vmatprep.subr.mxu0 0.0
        %1220 = vmatpush1.msra.mxu0 %v963
        %1221 = vmatprep.subr.mxu0 0.0
        %1222 = vmatpush1.msra.mxu0 %v964
        %1223 = vmatprep.subr.mxu0 0.0
        %1224 = vmatpush1.msra.mxu0 %v965
        %1225 = vmatprep.subr.mxu0 0.0
        %1226 = vmatpush1.msra.mxu0 %v966
        %1227 = vmatprep.subr.mxu0 0.0
        %1228 = vmatpush1.msra.mxu0 %v967
        %1229 = vmatprep.subr.mxu0 0.0
        %1230 = vmatpush1.msra.mxu0 %v968
        %1231 = vmatprep.subr.mxu0 0.0
        %1232 = vmatpush1.msra.mxu0 %v969
        %1233 = vmatprep.subr.mxu0 0.0
        %1234 = vmatpush1.msra.mxu0 %v970
        %1235 = vmatprep.subr.mxu0 0.0
        %1236 = vmatpush1.msra.mxu0 %v971
        %1237 = vmatprep.subr.mxu0 0.0
        %1238 = vmatpush1.msra.mxu0 %v972
        %1239 = vmatprep.subr.mxu0 0.0
        %1240 = vmatpush1.msra.mxu0 %v973
        %1241 = vmatprep.subr.mxu0 0.0
        %1242 = vmatpush1.msra.mxu0 %v974
        %1243 = vmatprep.subr.mxu0 0.0
        %1244 = vmatpush1.msra.mxu0 %v975
        %1245 = vmatprep.mubr.f32.mxu0 %v863
        %1246 = vmatmul.mubr.f32.gmra.mrb[0].mxu0 %v840
        %v1247 = vpop.f32.mrb[0].mxu0
        %v1248 = vadd.f32 %v1173, %v1247
        %v1249 = vpop.f32.mrb[0].mxu0
        %1250 = vmatprep.mubr.f32.mxu0 %v865
        %1251 = vmatmul.mubr.f32.gmra.mrb[0].mxu0 %v841
        %v1252 = vpop.f32.mrb[0].mxu0
        %v1253 = vadd.f32 %v1178, %v1252
        %v1254 = vpop.f32.mrb[0].mxu0
        %1255 = vdwg.mxu0
        %1256 = vmatprep.subr.mxu0 0.0
        %1257 = vmatpush1.msra.mxu0 %v976
        %1258 = vmatprep.subr.mxu0 0.0
        %1259 = vmatpush1.msra.mxu0 %v977
        %1260 = vmatprep.subr.mxu0 0.0
        %1261 = vmatpush1.msra.mxu0 %v978
        %1262 = vmatprep.subr.mxu0 0.0
        %1263 = vmatpush1.msra.mxu0 %v979
        %1264 = vmatprep.subr.mxu0 0.0
        %1265 = vmatpush1.msra.mxu0 %v980
        %1266 = vmatprep.subr.mxu0 0.0
        %1267 = vmatpush1.msra.mxu0 %v981
        %1268 = vmatprep.subr.mxu0 0.0
        %1269 = vmatpush1.msra.mxu0 %v982
        %1270 = vmatprep.subr.mxu0 0.0
        %1271 = vmatpush1.msra.mxu0 %v983
        %1272 = vmatprep.subr.mxu0 0.0
        %1273 = vmatpush1.msra.mxu0 %v984
        %1274 = vmatprep.subr.mxu0 0.0
        %1275 = vmatpush1.msra.mxu0 %v985
        %1276 = vmatprep.subr.mxu0 0.0
        %1277 = vmatpush1.msra.mxu0 %v986
        %1278 = vmatprep.subr.mxu0 0.0
        %1279 = vmatpush1.msra.mxu0 %v987
        %1280 = vmatprep.subr.mxu0 0.0
        %1281 = vmatpush1.msra.mxu0 %v988
        %1282 = vmatprep.subr.mxu0 0.0
        %1283 = vmatpush1.msra.mxu0 %v989
        %1284 = vmatprep.subr.mxu0 0.0
        %1285 = vmatpush1.msra.mxu0 %v990
        %1286 = vmatprep.subr.mxu0 0.0
        %1287 = vmatpush1.msra.mxu0 %v991
        %1288 = vmatprep.subr.mxu0 0.0
        %1289 = vmatpush1.msra.mxu0 %v992
        %1290 = vmatprep.subr.mxu0 0.0
        %1291 = vmatpush1.msra.mxu0 %v993
        %1292 = vmatprep.subr.mxu0 0.0
        %1293 = vmatpush1.msra.mxu0 %v994
        %1294 = vmatprep.subr.mxu0 0.0
        %1295 = vmatpush1.msra.mxu0 %v995
        %1296 = vmatprep.subr.mxu0 0.0
        %1297 = vmatpush1.msra.mxu0 %v996
        %1298 = vmatprep.subr.mxu0 0.0
        %1299 = vmatpush1.msra.mxu0 %v997
        %1300 = vmatprep.subr.mxu0 0.0
        %1301 = vmatpush1.msra.mxu0 %v998
        %1302 = vmatprep.subr.mxu0 0.0
        %1303 = vmatpush1.msra.mxu0 %v999
        %1304 = vmatprep.subr.mxu0 0.0
        %1305 = vmatpush1.msra.mxu0 %v1000
        %1306 = vmatprep.subr.mxu0 0.0
        %1307 = vmatpush1.msra.mxu0 %v1001
        %1308 = vmatprep.subr.mxu0 0.0
        %1309 = vmatpush1.msra.mxu0 %v1002
        %1310 = vmatprep.subr.mxu0 0.0
        %1311 = vmatpush1.msra.mxu0 %v1003
        %1312 = vmatprep.subr.mxu0 0.0
        %1313 = vmatpush1.msra.mxu0 %v1004
        %1314 = vmatprep.subr.mxu0 0.0
        %1315 = vmatpush1.msra.mxu0 %v1005
        %1316 = vmatprep.subr.mxu0 0.0
        %1317 = vmatpush1.msra.mxu0 %v1006
        %1318 = vmatprep.subr.mxu0 0.0
        %1319 = vmatpush1.msra.mxu0 %v1007
        %1320 = vmatprep.mubr.f32.mxu0 %v868
        %1321 = vmatmul.mubr.f32.gmra.mrb[0].mxu0 %v873
        %v1322 = vpop.f32.mrb[0].mxu0
        %v1323 = vadd.f32 %v1248, %v1322
        %v1324 = vpop.f32.mrb[0].mxu0
        %1325 = vmatprep.mubr.f32.mxu0 %v871
        %1326 = vmatmul.mubr.f32.gmra.mrb[0].mxu0 %v875
        %v1327 = vpop.f32.mrb[0].mxu0
        %v1328 = vadd.f32 %v1253, %v1327
        %v1329 = vpop.f32.mrb[0].mxu0
        %1330 = vdwg.mxu0
        %1331 = vmatprep.subr.mxu0 0.0
        %1332 = vmatpush1.msra.mxu0 %v1008
        %1333 = vmatprep.subr.mxu0 0.0
        %1334 = vmatpush1.msra.mxu0 %v1009
        %1335 = vmatprep.subr.mxu0 0.0
        %1336 = vmatpush1.msra.mxu0 %v1010
        %1337 = vmatprep.subr.mxu0 0.0
        %1338 = vmatpush1.msra.mxu0 %v1011
        %1339 = vmatprep.subr.mxu0 0.0
        %1340 = vmatpush1.msra.mxu0 %v1012
        %1341 = vmatprep.subr.mxu0 0.0
        %1342 = vmatpush1.msra.mxu0 %v1013
        %1343 = vmatprep.subr.mxu0 0.0
        %1344 = vmatpush1.msra.mxu0 %v1014
        %1345 = vmatprep.subr.mxu0 0.0
        %1346 = vmatpush1.msra.mxu0 %v1015
        %1347 = vmatprep.subr.mxu0 0.0
        %1348 = vmatpush1.msra.mxu0 %v1016
        %1349 = vmatprep.subr.mxu0 0.0
        %1350 = vmatpush1.msra.mxu0 %v1017
        %1351 = vmatprep.subr.mxu0 0.0
        %1352 = vmatpush1.msra.mxu0 %v1018
        %1353 = vmatprep.subr.mxu0 0.0
        %1354 = vmatpush1.msra.mxu0 %v1019
        %1355 = vmatprep.subr.mxu0 0.0
        %1356 = vmatpush1.msra.mxu0 %v1020
        %1357 = vmatprep.subr.mxu0 0.0
        %1358 = vmatpush1.msra.mxu0 %v1021
        %1359 = vmatprep.subr.mxu0 0.0
        %1360 = vmatpush1.msra.mxu0 %v1022
        %1361 = vmatprep.subr.mxu0 0.0
        %1362 = vmatpush1.msra.mxu0 %v1023
        %1363 = vmatprep.subr.mxu0 0.0
        %1364 = vmatpush1.msra.mxu0 0.0
        %1365 = vmatprep.subr.mxu0 0.0
        %1366 = vmatpush1.msra.mxu0 0.0
        %1367 = vmatprep.subr.mxu0 0.0
        %1368 = vmatpush1.msra.mxu0 0.0
        %1369 = vmatprep.subr.mxu0 0.0
        %1370 = vmatpush1.msra.mxu0 0.0
        %1371 = vmatprep.subr.mxu0 0.0
        %1372 = vmatpush1.msra.mxu0 0.0
        %1373 = vmatprep.subr.mxu0 0.0
        %1374 = vmatpush1.msra.mxu0 0.0
        %1375 = vmatprep.subr.mxu0 0.0
        %1376 = vmatpush1.msra.mxu0 0.0
        %1377 = vmatprep.subr.mxu0 0.0
        %1378 = vmatpush1.msra.mxu0 0.0
        %1379 = vmatprep.subr.mxu0 0.0
        %1380 = vmatpush1.msra.mxu0 0.0
        %1381 = vmatprep.subr.mxu0 0.0
        %1382 = vmatpush1.msra.mxu0 0.0
        %1383 = vmatprep.subr.mxu0 0.0
        %1384 = vmatpush1.msra.mxu0 0.0
        %1385 = vmatprep.subr.mxu0 0.0
        %1386 = vmatpush1.msra.mxu0 0.0
        %1387 = vmatprep.subr.mxu0 0.0
        %1388 = vmatpush1.msra.mxu0 0.0
        %1389 = vmatprep.subr.mxu0 0.0
        %1390 = vmatpush1.msra.mxu0 0.0
        %1391 = vmatprep.subr.mxu0 0.0
        %1392 = vmatpush1.msra.mxu0 0.0
        %1393 = vmatprep.subr.mxu0 0.0
        %1394 = vmatpush1.msra.mxu0 0.0
        %1395 = vmatprep.mubr.f32.mxu0 0.0
        %1396 = vmatmul.mubr.f32.gmra.mrb[0].mxu0 %v877
        %v1397 = vpop.f32.mrb[0].mxu0
        %v1398 = vadd.f32 %v1323, %v1397
        %v1399 = vpop.f32.mrb[0].mxu0
        %1400 = vmatprep.mubr.f32.mxu0 0.0
        %1401 = vmatmul.mubr.f32.gmra.mrb[0].mxu0 %v879
        %v1402 = vpop.f32.mrb[0].mxu0
        %v1403 = vadd.f32 %v1328, %v1402
        %v1404 = vpop.f32.mrb[0].mxu0
        %1405 = vdwg.mxu0
        %v1406 = vadd.f32 %v1398, %v272
        %v1407 = vadd.f32 %v1403, %v273
        %v1408 = vmax.f32 %v1406, 0.0
        %v1409 = vmax.f32 %v1407, 0.0
        %1410 = vst [vmem:[%s271] sm:$0xff] %v1408
        %1411 = vst [vmem:[%s271 + $0x8] sm:$0xff] %v1409
        %s1412 = sand.u32 %s141, 1
        %s1413 = scalar_lea.sflag [#allocation4], %s1412
        %s1414 = sand.u32 %s141, 1
        %s1415 = smul.addr %s1414, 16
        %s1416 = scalar_lea.vmem [#allocation8], %s1415
        // Predicated region
        $region53: #{tpu_custom_call.1} parent=39 // pred_check
          %p1417 = pneg %p151
        $region54: #{tpu_custom_call.1} parent=39 // pred_check_branch
          %1419 = sbr.rel (%p1417) target = $region56
        $region55: #{tpu_custom_call.1} parent=39 // pred_region
          %s1421 = ssub.s32 256, 256
          %1422 = vsyncadd %s1413, %s1421
          %s1423 = smul.addr %s23, 2
          %s1424 = smul.addr %s1423, 128
          %s1425 = scalar_lea.hbm %s5, %s1424
          %s1426 = sshll.u32 %s1416, 4
          %s1427 = int_to_ptr.vmem [resolvable:$true] %s1426
          %1432 = dma.vmem_to_hbm [thread:$0]  %s1427, 256, %s1425, %s1413, 128, 128, 8
        $region56: #{tpu_custom_call.1} parent=39 // pred_fallthru
          _
      $region40: #{tpu_custom_call.1} parent=5 // pred_fallthru
        _
      %p1433 = scmp.le.s32.totalorder 2, %s18
      // Predicated region
      $region57: #{tpu_custom_call.1} parent=5 // pred_check
        %p1434 = pneg %p1433
      $region58: #{tpu_custom_call.1} parent=5 // pred_check_branch
        %1436 = sbr.rel (%p1434) target = $region60
      $region59: #{tpu_custom_call.1} parent=5 // pred_region
        %s1437 = ssub.s32 %s18, 2
        // Predicated region
        $region61: #{tpu_custom_call.1} parent=59 // pred_check
          %p1438 = pneg %p157
        $region62: #{tpu_custom_call.1} parent=59 // pred_check_branch
          %1440 = sbr.rel (%p1438) target = $region64
        $region63: #{tpu_custom_call.1} parent=59 // pred_region
          %s1441 = sand.u32 %s142, 1
          %s1442 = scalar_lea.sflag [#allocation4], %s1441
          %s1443 = sand.u32 %s142, 1
          %s1444 = smul.addr %s1443, 16
          %s1445 = scalar_lea.vmem [#allocation8], %s1444
          %1446 = dma.done %s1442, 256
        $region64: #{tpu_custom_call.1} parent=59 // pred_fallthru
          _
      $region60: #{tpu_custom_call.1} parent=5 // pred_fallthru
        _
    $region6: #{tpu_custom_call.1} parent=1 // loop_footer
      %s22 = sadd.s32 1, %s18
    $region7: #{tpu_custom_call.1} parent=1 // loop_footer_branch
      %17 = sbr.rel target = $region3
    $region8: #{tpu_custom_call.1} parent=1 // loop_exit
      _
    %1447 = vsyncpa [#allocation3], 1
    %s1448 = scalar_lea.sflag [#allocation3], 1
    %1449 = vsyncpa %s1448, 1
    %1450 = vsyncpa [#allocation6], 1
    %1451 = vsyncpa [#allocation4], 1
    %s1452 = scalar_lea.sflag [#allocation4], 1
    %1453 = vsyncpa %s1452, 1

</llo_original>
